<compile_context>
chip_gen: v5e
topology: v5e:2x2
jax: 0.10.0
libtpu: 0.0.40
codegen_flags: <defaults>
</compile_context>

<pallas_src>
import functools

import jax
import jax.numpy as jnp
from jax.experimental import pallas as pl
from jax.experimental.pallas import tpu as pltpu

EPS = 1e-6  # norm_layer = partial(nn.LayerNorm, eps=1e-6)
_SQRT_2_OVER_PI = 0.7978845608028654


# ---------------------------------------------------------------------------
# helpers used inside kernels (VPU / EUP ops only)
# ---------------------------------------------------------------------------
def _layernorm(x, g, b):
    mu = jnp.mean(x, axis=-1, keepdims=True)
    var = jnp.mean(jnp.square(x - mu), axis=-1, keepdims=True)
    return (x - mu) * jax.lax.rsqrt(var + EPS) * g + b


def _gelu_tanh(x):
    # tanh-approximate GELU (PyTorch nn.GELU(approximate='tanh')): tanh rides
    # the EUP slot instead of a long rational-erf VPU chain.
    return 0.5 * x * (1.0 + jnp.tanh(_SQRT_2_OVER_PI * (x + 0.044715 * x * x * x)))


# ---------------------------------------------------------------------------
# patch embed kernel: conv-as-matmul, fused with cls-token append + pos add
# ---------------------------------------------------------------------------
def _patch_embed_kernel(p_ref, w_ref, b_ref, cls_ref, pos_ref, o_ref):
    P = p_ref.shape[1]
    patches = p_ref[0].astype(jnp.bfloat16)                          # (P, Cpp)
    tok = (jnp.dot(patches, w_ref[...],
                   preferred_element_type=jnp.float32) + b_ref[...])  # (P, D)
    # Bulk patch-token store starts at sublane 0 (unmasked); cls token is the
    # single odd row at the end. pos_ref is pre-reordered to match.
    o_ref[0, 0:P, :] = tok + pos_ref[0:P, :]
    o_ref[0, P:P + 1, :] = cls_ref[...] + pos_ref[P:P + 1, :]


def patch_embed(patches, w_pe, b_pe, cls_tok, pos):
    B, P, Cpp = patches.shape
    D = w_pe.shape[1]
    N = P + 1
    return pl.pallas_call(
        _patch_embed_kernel,
        out_shape=jax.ShapeDtypeStruct((B, N, D), jnp.float32),
        grid=(B,),
        in_specs=[
            pl.BlockSpec((1, P, Cpp), lambda b: (b, 0, 0)),
            pl.BlockSpec((Cpp, D), lambda b: (0, 0)),
            pl.BlockSpec((1, D), lambda b: (0, 0)),
            pl.BlockSpec((1, D), lambda b: (0, 0)),
            pl.BlockSpec((N, D), lambda b: (0, 0)),
        ],
        out_specs=pl.BlockSpec((1, N, D), lambda b: (b, 0, 0)),
        compiler_params=pltpu.CompilerParams(dimension_semantics=("parallel",)),
    )(patches, w_pe, b_pe, cls_tok, pos)


# ---------------------------------------------------------------------------
# transformer block kernel (LN -> MHSA -> residual -> LN -> MLP -> residual)
# ---------------------------------------------------------------------------
def _block_kernel(x_ref, ln1g, ln1b, w_qkv, b_qkv, w_proj, b_proj,
                  ln2g, ln2b, w1, b1, w2, b2, o_ref, *, num_heads):
    f32, bf16 = jnp.float32, jnp.bfloat16
    x = x_ref[0]                                   # (N, C) f32
    _, C = x.shape
    H = num_heads
    hd = C // H

    # --- Attention ---
    xn = _layernorm(x, ln1g[...], ln1b[...])
    # Single lane-dense QKV projection (scale already folded into q cols/bias).
    qkv = jnp.dot(xn.astype(bf16), w_qkv[...],
                  preferred_element_type=f32) + b_qkv[...]           # (N, 3C)
    qkv_b = qkv.astype(bf16)

    # Per-head layout only for the attention einsums: lane slices + stack.
    q = jnp.stack([qkv_b[:, h * hd:(h + 1) * hd] for h in range(H)], axis=0)
    k = jnp.stack([qkv_b[:, C + h * hd:C + (h + 1) * hd] for h in range(H)], axis=0)
    v = jnp.stack([qkv_b[:, 2 * C + h * hd:2 * C + (h + 1) * hd] for h in range(H)], axis=0)

    s = jnp.einsum('hnd,hmd->hnm', q, k, preferred_element_type=f32)  # (H, N, N)
    s = s - jnp.max(s, axis=-1, keepdims=True)
    e = jnp.exp(s)
    p = e * pl.reciprocal(jnp.sum(e, axis=-1, keepdims=True), approx=True)

    ctx = jnp.einsum('hnm,hmd->hnd', p.astype(bf16), v,
                     preferred_element_type=f32)                      # (H, N, hd)
    ctx_b = ctx.astype(bf16)
    # Head merge as a lane concat -> one full-width (N, C) @ (C, C) matmul.
    ctx2d = jnp.concatenate([ctx_b[h] for h in range(H)], axis=-1)    # (N, C)
    attn = jnp.dot(ctx2d, w_proj[...], preferred_element_type=f32) + b_proj[...]
    x = x + attn                                                      # residual

    # --- MLP ---
    xn2 = _layernorm(x, ln2g[...], ln2b[...])
    h1 = jnp.dot(xn2.astype(bf16), w1[...], preferred_element_type=f32) + b1[...]
    h1 = _gelu_tanh(h1)
    h2 = jnp.dot(h1.astype(bf16), w2[...], preferred_element_type=f32) + b2[...]
    o_ref[0] = x + h2                                                 # residual


def transformer_block(x, p, num_heads):
    B, N, C = x.shape
    kern = functools.partial(_block_kernel, num_heads=num_heads)
    args = [p['ln1_g'], p['ln1_b'],
            p['w_qkv'], p['b_qkv'], p['w_proj'], p['b_proj'],
            p['ln2_g'], p['ln2_b'],
            p['w_fc1'], p['b_fc1'], p['w_fc2'], p['b_fc2']]
    # Constant-index weight blocks: Pallas skips re-fetching blocks whose index
    # map output is unchanged across grid steps, so weights are DMA'd once per
    # pallas_call regardless of batch size.
    param_specs = [pl.BlockSpec(a.shape, lambda b, nd=a.ndim: (0,) * nd)
                   for a in args]
    return pl.pallas_call(
        kern,
        out_shape=jax.ShapeDtypeStruct((B, N, C), jnp.float32),
        grid=(B,),
        in_specs=[pl.BlockSpec((1, N, C), lambda b: (b, 0, 0))] + param_specs,
        out_specs=pl.BlockSpec((1, N, C), lambda b: (b, 0, 0)),
        input_output_aliases={0: 0},   # residual stream updated in place in HBM
        compiler_params=pltpu.CompilerParams(
            dimension_semantics=("parallel",),
            vmem_limit_bytes=48 * 1024 * 1024),
    )(x, *args)


# ---------------------------------------------------------------------------
# final LayerNorm + classification head (row-tiled, lane-dense padded output)
# ---------------------------------------------------------------------------
def _ln_head_kernel(x_ref, g_ref, b_ref, w_ref, bh_ref, o_ref):
    xn = _layernorm(x_ref[...], g_ref[...], b_ref[...])
    o_ref[...] = (jnp.dot(xn.astype(jnp.bfloat16), w_ref[...],
                          preferred_element_type=jnp.float32) + bh_ref[...])


def ln_head(x, g, b, w, bh):
    M, C = x.shape
    Ncp = w.shape[1]                           # padded to a multiple of 128
    tm = 128 if (M % 128 == 0) else M          # row tile (full M at toy sizes)
    return pl.pallas_call(
        _ln_head_kernel,
        out_shape=jax.ShapeDtypeStruct((M, Ncp), jnp.float32),
        grid=(M // tm,),
        in_specs=[pl.BlockSpec((tm, C), lambda i: (i, 0)),
                  pl.BlockSpec((1, C), lambda i: (0, 0)),
                  pl.BlockSpec((1, C), lambda i: (0, 0)),
                  pl.BlockSpec((C, Ncp), lambda i: (0, 0)),
                  pl.BlockSpec((1, Ncp), lambda i: (0, 0))],
        out_specs=pl.BlockSpec((tm, Ncp), lambda i: (i, 0)),
        compiler_params=pltpu.CompilerParams(dimension_semantics=("parallel",)),
    )(x, g, b, w, bh)


# ---------------------------------------------------------------------------
# glue (reshapes / parameter packing) in plain JAX
# ---------------------------------------------------------------------------
def extract_patches(x, p):
    # x: (B, C, H, W) NCHW -> (B, num_patches, C*p*p), patch flattened as (C,p,p)
    B, C, H, W = x.shape
    x = x.reshape(B, C, H // p, p, W // p, p)
    x = x.transpose(0, 2, 4, 1, 3, 5)
    return x.reshape(B, (H // p) * (W // p), C * p * p)


@functools.partial(jax.jit, static_argnums=(2, 3, 4))
def vit_forward(kp, x, patch_size, num_heads, num_classes):
    patches = extract_patches(x, patch_size)                      # (B, P, Cpp)
    h = patch_embed(patches, kp['w_pe'], kp['b_pe'], kp['cls'], kp['pos'])
    for blk in kp['blocks']:
        h = transformer_block(h, blk, num_heads)
    cls_out = h[:, -1, :]           # cls token is stored in the LAST row
    logits = ln_head(cls_out, kp['norm_g'], kp['norm_b'],
                     kp['head_w'], kp['head_b'])
    return logits[:, :num_classes]  # drop the lane padding of the head


def init_vit_params(key, img_size, patch_size, in_chans, embed_dim, depth,
                    num_heads, mlp_ratio, num_classes):
    """Random params in PyTorch nn.Module layouts (Linear weight = (out, in))."""
    num_patches = (img_size // patch_size) ** 2
    hidden = int(embed_dim * mlp_ratio)
    ks = jax.random.split(key, 4 + depth)
    std = 0.02

    def tn(k, shape):  # deterministic stand-in for trunc_normal_(std=0.02)
        return std * jax.random.normal(k, shape, jnp.float32)

    params = {
        'conv_w': tn(ks[0], (embed_dim, in_chans, patch_size, patch_size)),
        'conv_b': jnp.zeros((embed_dim,), jnp.float32),
        'cls_token': tn(ks[1], (1, 1, embed_dim)),
        'pos_embed': tn(ks[2], (1, num_patches + 1, embed_dim)),
        'norm_g': jnp.ones((embed_dim,), jnp.float32),
        'norm_b': jnp.zeros((embed_dim,), jnp.float32),
        'head_w': tn(ks[3], (num_classes, embed_dim)),
        'head_b': jnp.zeros((num_classes,), jnp.float32),
        'blocks': [],
    }
    for i in range(depth):
        bk = jax.random.split(ks[4 + i], 4)
        params['blocks'].append({
            'ln1_g': jnp.ones((embed_dim,), jnp.float32),
            'ln1_b': jnp.zeros((embed_dim,), jnp.float32),
            'w_qkv': tn(bk[0], (3 * embed_dim, embed_dim)),
            'b_qkv': jnp.zeros((3 * embed_dim,), jnp.float32),
            'w_proj': tn(bk[1], (embed_dim, embed_dim)),
            'b_proj': jnp.zeros((embed_dim,), jnp.float32),
            'ln2_g': jnp.ones((embed_dim,), jnp.float32),
            'ln2_b': jnp.zeros((embed_dim,), jnp.float32),
            'w_fc1': tn(bk[2], (hidden, embed_dim)),
            'b_fc1': jnp.zeros((hidden,), jnp.float32),
            'w_fc2': tn(bk[3], (embed_dim, hidden)),
            'b_fc2': jnp.zeros((embed_dim,), jnp.float32),
        })
    return params


def prepare_params(p, num_heads):
    """One-time repack:
       * bf16 matmul weights (f32 accumulation happens on the MXU),
       * W_qkv packed as a single (C, 3C) matrix with the attention scale
         folded into the q columns and the q bias,
       * proj / fc weights transposed to (in, out),
       * pos_embed reordered so the cls position is the LAST row,
       * classifier head padded to a 128-lane multiple,
       * biases / LN params as (1, n) lane-dense f32 rows."""
    D = p['cls_token'].shape[-1]
    H = num_heads
    hd = D // H
    scale = float(hd) ** (-0.5)        # qk_scale=None default -> head_dim**-0.5
    bf, f32 = jnp.bfloat16, jnp.float32

    pos = p['pos_embed'][0]                                    # (N, D), row 0 = cls
    pos_reordered = jnp.concatenate([pos[1:], pos[:1]], axis=0)

    num_classes = p['head_w'].shape[0]
    nc_pad = ((num_classes + 127) // 128) * 128
    head_w = jnp.pad(p['head_w'].T, ((0, 0), (0, nc_pad - num_classes)))
    head_b = jnp.pad(p['head_b'], (0, nc_pad - num_classes)).reshape(1, nc_pad)

    out = {
        'w_pe': p['conv_w'].reshape(D, -1).T.astype(bf),       # (C*ph*pw, D)
        'b_pe': p['conv_b'].reshape(1, D).astype(f32),
        'cls': p['cls_token'].reshape(1, D).astype(f32),
        'pos': pos_reordered.astype(f32),                      # (N, D), cls last
        'norm_g': p['norm_g'].reshape(1, D).astype(f32),
        'norm_b': p['norm_b'].reshape(1, D).astype(f32),
        'head_w': head_w.astype(bf),                           # (D, nc_pad)
        'head_b': head_b.astype(f32),
        'blocks': [],
    }
    scale_vec = jnp.concatenate([jnp.full((D,), scale, f32),
                                 jnp.ones((2 * D,), f32)])     # scale only q
    for b in p['blocks']:
        w_qkv = (b['w_qkv'] * scale_vec[:, None]).T            # (D, 3D): [q|k|v]
        b_qkv = (b['b_qkv'] * scale_vec).reshape(1, 3 * D)
        out['blocks'].append({
            'ln1_g': b['ln1_g'].reshape(1, D).astype(f32),
            'ln1_b': b['ln1_b'].reshape(1, D).astype(f32),
            'w_qkv': w_qkv.astype(bf),
            'b_qkv': b_qkv.astype(f32),
            'w_proj': b['w_proj'].T.astype(bf),                # (C_in, C_out)
            'b_proj': b['b_proj'].reshape(1, D).astype(f32),
            'ln2_g': b['ln2_g'].reshape(1, D).astype(f32),
            'ln2_b': b['ln2_b'].reshape(1, D).astype(f32),
            'w_fc1': b['w_fc1'].T.astype(bf),
            'b_fc1': b['b_fc1'].reshape(1, -1).astype(f32),
            'w_fc2': b['w_fc2'].T.astype(bf),
            'b_fc2': b['b_fc2'].reshape(1, -1).astype(f32),
        })
    return out


if __name__ == "__main__":
    # Small shapes consistent with the module: img=16, patch=4 -> 16 patches, N=17.
    B, in_chans, img_size, patch_size = 2, 3, 16, 4
    embed_dim, depth, num_heads, mlp_ratio, num_classes = 32, 2, 4, 4.0, 10

    key = jax.random.PRNGKey(0)
    k_params, k_x = jax.random.split(key)
    torch_layout_params = init_vit_params(k_params, img_size, patch_size,
                                          in_chans, embed_dim, depth, num_heads,
                                          mlp_ratio, num_classes)
    kparams = prepare_params(torch_layout_params, num_heads)  # bf16 / fused packs
    x = jax.random.normal(k_x, (B, in_chans, img_size, img_size), jnp.float32)

    logits = vit_forward(kparams, x, patch_size, num_heads, num_classes)
    logits = jax.block_until_ready(logits)
    assert logits.shape == (B, num_classes)
    assert bool(jnp.all(jnp.isfinite(logits)))
    print("KERNEL_OK")
</pallas_src>

<mosaic_0001>
module attributes {stable_mosaic.version = 11 : i64} {
  func.func @_patch_embed_kernel(%arg0: i32, %arg1: memref<1x16x48xf32, #tpu.memory_space<vmem>>, %arg2: memref<48x32xbf16, #tpu.memory_space<vmem>>, %arg3: memref<1x32xf32, #tpu.memory_space<vmem>>, %arg4: memref<1x32xf32, #tpu.memory_space<vmem>>, %arg5: memref<17x32xf32, #tpu.memory_space<vmem>>, %arg6: memref<1x17x32xf32, #tpu.memory_space<vmem>>) attributes {dimension_semantics = [#tpu.dimension_semantics<parallel>], iteration_bounds = array<i64: 2>, scalar_prefetch = 0 : i64, scratch_operands = 0 : i64, tpu.core_type = #tpu.core_type<tc>, window_params = [{transform_indices = @transform_0, window_bounds = array<i64: 1, 16, 48>}, {pipeline_mode = #tpu.pipeline_mode<synchronous>, transform_indices = @transform_1, window_bounds = array<i64: 48, 32>}, {pipeline_mode = #tpu.pipeline_mode<synchronous>, transform_indices = @transform_2, window_bounds = array<i64: 1, 32>}, {pipeline_mode = #tpu.pipeline_mode<synchronous>, transform_indices = @transform_3, window_bounds = array<i64: 1, 32>}, {pipeline_mode = #tpu.pipeline_mode<synchronous>, transform_indices = @transform_4, window_bounds = array<i64: 17, 32>}, {transform_indices = @transform_5, window_bounds = array<i64: 1, 17, 32>}]} {
    %c0 = arith.constant 0 : index
    %c0_0 = arith.constant 0 : index
    %c0_1 = arith.constant 0 : index
    %0 = vector.load %arg1[%c0, %c0_0, %c0_1] : memref<1x16x48xf32, #tpu.memory_space<vmem>>, vector<1x16x48xf32>
    %1 = vector.shape_cast %0 : vector<1x16x48xf32> to vector<16x48xf32>
    %2 = arith.truncf %1 : vector<16x48xf32> to vector<16x48xbf16>
    %c0_2 = arith.constant 0 : index
    %c0_3 = arith.constant 0 : index
    %3 = vector.load %arg2[%c0_2, %c0_3] : memref<48x32xbf16, #tpu.memory_space<vmem>>, vector<48x32xbf16>
    %cst = arith.constant dense<0.000000e+00> : vector<16x32xf32>
    %4 = tpu.matmul %2, %3, %cst {dimension_numbers = #tpu.dot_dimension_numbers<[1], [0], [0], [1], [0, 0, 1, 1], [], []>} : vector<16x48xbf16>, vector<48x32xbf16>, vector<16x32xf32> -> vector<16x32xf32>
    %c0_4 = arith.constant 0 : index
    %c0_5 = arith.constant 0 : index
    %5 = vector.load %arg3[%c0_4, %c0_5] : memref<1x32xf32, #tpu.memory_space<vmem>>, vector<1x32xf32>
    %6 = vector.broadcast %5 : vector<1x32xf32> to vector<16x32xf32>
    %7 = arith.addf %4, %6 : vector<16x32xf32>
    %c0_6 = arith.constant 0 : index
    %c0_7 = arith.constant 0 : index
    %8 = vector.load %arg5[%c0_6, %c0_7] : memref<17x32xf32, #tpu.memory_space<vmem>>, vector<16x32xf32>
    %9 = arith.addf %7, %8 : vector<16x32xf32>
    %c0_8 = arith.constant 0 : index
    %c0_9 = arith.constant 0 : index
    %c0_10 = arith.constant 0 : index
    %10 = vector.load %arg6[%c0_8, %c0_9, %c0_10] : memref<1x17x32xf32, #tpu.memory_space<vmem>>, vector<1x16x32xf32>
    %11 = vector.shape_cast %10 : vector<1x16x32xf32> to vector<16x32xf32>
    %12 = vector.shape_cast %9 : vector<16x32xf32> to vector<1x16x32xf32>
    tpu.vector_store %arg6[%c0_8, %c0_9, %c0_10], %12 {strides = array<i32>} : memref<1x17x32xf32, #tpu.memory_space<vmem>>, vector<1x16x32xf32>,
    %c0_11 = arith.constant 0 : index
    %c0_12 = arith.constant 0 : index
    %13 = vector.load %arg4[%c0_11, %c0_12] : memref<1x32xf32, #tpu.memory_space<vmem>>, vector<1x32xf32>
    %c16 = arith.constant 16 : index
    %c0_13 = arith.constant 0 : index
    %14 = vector.load %arg5[%c16, %c0_13] : memref<17x32xf32, #tpu.memory_space<vmem>>, vector<1x32xf32>
    %15 = arith.addf %13, %14 : vector<1x32xf32>
    %c0_14 = arith.constant 0 : index
    %c16_15 = arith.constant 16 : index
    %c0_16 = arith.constant 0 : index
    %16 = vector.load %arg6[%c0_14, %c16_15, %c0_16] : memref<1x17x32xf32, #tpu.memory_space<vmem>>, vector<1x1x32xf32>
    %17 = vector.shape_cast %16 : vector<1x1x32xf32> to vector<1x32xf32>
    %18 = vector.shape_cast %15 : vector<1x32xf32> to vector<1x1x32xf32>
    tpu.vector_store %arg6[%c0_14, %c16_15, %c0_16], %18 {strides = array<i32>} : memref<1x17x32xf32, #tpu.memory_space<vmem>>, vector<1x1x32xf32>,
    return
  }
  func.func @transform_0(%arg0: i32) -> (i32, i32, i32) {
    %c0_i32 = arith.constant 0 : i32
    %c0_i32_0 = arith.constant 0 : i32
    %c0_i32_1 = arith.constant 0 : i32
    return %arg0, %c0_i32, %c0_i32_0 : i32, i32, i32
  }
  func.func @transform_1(%arg0: i32) -> (i32, i32) {
    %c0_i32 = arith.constant 0 : i32
    %c0_i32_0 = arith.constant 0 : i32
    %c0_i32_1 = arith.constant 0 : i32
    return %c0_i32, %c0_i32_0 : i32, i32
  }
  func.func @transform_2(%arg0: i32) -> (i32, i32) {
    %c0_i32 = arith.constant 0 : i32
    %c0_i32_0 = arith.constant 0 : i32
    %c0_i32_1 = arith.constant 0 : i32
    return %c0_i32, %c0_i32_0 : i32, i32
  }
  func.func @transform_3(%arg0: i32) -> (i32, i32) {
    %c0_i32 = arith.constant 0 : i32
    %c0_i32_0 = arith.constant 0 : i32
    %c0_i32_1 = arith.constant 0 : i32
    return %c0_i32, %c0_i32_0 : i32, i32
  }
  func.func @transform_4(%arg0: i32) -> (i32, i32) {
    %c0_i32 = arith.constant 0 : i32
    %c0_i32_0 = arith.constant 0 : i32
    %c0_i32_1 = arith.constant 0 : i32
    return %c0_i32, %c0_i32_0 : i32, i32
  }
  func.func @transform_5(%arg0: i32) -> (i32, i32, i32) {
    %c0_i32 = arith.constant 0 : i32
    %c0_i32_0 = arith.constant 0 : i32
    %c0_i32_1 = arith.constant 0 : i32
    return %arg0, %c0_i32, %c0_i32_0 : i32, i32, i32
  }
}

module attributes {stable_mosaic.version = 11 : i64} {
  func.func @_ln_head_kernel(%arg0: i32, %arg1: memref<2x32xf32, #tpu.memory_space<vmem>>, %arg2: memref<1x32xf32, #tpu.memory_space<vmem>>, %arg3: memref<1x32xf32, #tpu.memory_space<vmem>>, %arg4: memref<32x128xbf16, #tpu.memory_space<vmem>>, %arg5: memref<1x128xf32, #tpu.memory_space<vmem>>, %arg6: memref<2x128xf32, #tpu.memory_space<vmem>>) attributes {dimension_semantics = [#tpu.dimension_semantics<parallel>], iteration_bounds = array<i64: 1>, scalar_prefetch = 0 : i64, scratch_operands = 0 : i64, tpu.core_type = #tpu.core_type<tc>, window_params = [{transform_indices = @transform_0, window_bounds = array<i64: 2, 32>}, {pipeline_mode = #tpu.pipeline_mode<synchronous>, transform_indices = @transform_1, window_bounds = array<i64: 1, 32>}, {pipeline_mode = #tpu.pipeline_mode<synchronous>, transform_indices = @transform_2, window_bounds = array<i64: 1, 32>}, {pipeline_mode = #tpu.pipeline_mode<synchronous>, transform_indices = @transform_3, window_bounds = array<i64: 32, 128>}, {pipeline_mode = #tpu.pipeline_mode<synchronous>, transform_indices = @transform_4, window_bounds = array<i64: 1, 128>}, {transform_indices = @transform_5, window_bounds = array<i64: 2, 128>}]} {
    %c0 = arith.constant 0 : index
    %c0_0 = arith.constant 0 : index
    %0 = vector.load %arg1[%c0, %c0_0] : memref<2x32xf32, #tpu.memory_space<vmem>>, vector<2x32xf32>
    %c0_1 = arith.constant 0 : index
    %c0_2 = arith.constant 0 : index
    %1 = vector.load %arg2[%c0_1, %c0_2] : memref<1x32xf32, #tpu.memory_space<vmem>>, vector<1x32xf32>
    %c0_3 = arith.constant 0 : index
    %c0_4 = arith.constant 0 : index
    %2 = vector.load %arg3[%c0_3, %c0_4] : memref<1x32xf32, #tpu.memory_space<vmem>>, vector<1x32xf32>
    %cst = arith.constant dense<0.000000e+00> : vector<2xf32>
    %3 = vector.multi_reduction <add>, %0, %cst [1] : vector<2x32xf32> to vector<2xf32>
    %4 = vector.shape_cast %3 : vector<2xf32> to vector<2x1xf32>
    %cst_5 = arith.constant 3.200000e+01 : f32
    %5 = vector.broadcast %cst_5 : f32 to vector<2x1xf32>
    %6 = arith.divf %4, %5 : vector<2x1xf32>
    %7 = vector.broadcast %6 : vector<2x1xf32> to vector<2x32xf32>
    %8 = arith.subf %0, %7 : vector<2x32xf32>
    %9 = arith.mulf %8, %8 : vector<2x32xf32>
    %cst_6 = arith.constant dense<0.000000e+00> : vector<2xf32>
    %10 = vector.multi_reduction <add>, %9, %cst_6 [1] : vector<2x32xf32> to vector<2xf32>
    %11 = vector.shape_cast %10 : vector<2xf32> to vector<2x1xf32>
    %cst_7 = arith.constant 3.200000e+01 : f32
    %12 = vector.broadcast %cst_7 : f32 to vector<2x1xf32>
    %13 = arith.divf %11, %12 : vector<2x1xf32>
    %14 = vector.broadcast %6 : vector<2x1xf32> to vector<2x32xf32>
    %15 = arith.subf %0, %14 : vector<2x32xf32>
    %cst_8 = arith.constant 9.99999997E-7 : f32
    %16 = vector.broadcast %cst_8 : f32 to vector<2x1xf32>
    %17 = arith.addf %13, %16 : vector<2x1xf32>
    %18 = math.rsqrt %17 : vector<2x1xf32>
    %19 = vector.broadcast %18 : vector<2x1xf32> to vector<2x32xf32>
    %20 = arith.mulf %15, %19 : vector<2x32xf32>
    %21 = vector.broadcast %1 : vector<1x32xf32> to vector<2x32xf32>
    %22 = arith.mulf %20, %21 : vector<2x32xf32>
    %23 = vector.broadcast %2 : vector<1x32xf32> to vector<2x32xf32>
    %24 = arith.addf %22, %23 : vector<2x32xf32>
    %25 = arith.truncf %24 : vector<2x32xf32> to vector<2x32xbf16>
    %c0_9 = arith.constant 0 : index
    %c0_10 = arith.constant 0 : index
    %26 = vector.load %arg4[%c0_9, %c0_10] : memref<32x128xbf16, #tpu.memory_space<vmem>>, vector<32x128xbf16>
    %cst_11 = arith.constant dense<0.000000e+00> : vector<2x128xf32>
    %27 = tpu.matmul %25, %26, %cst_11 {dimension_numbers = #tpu.dot_dimension_numbers<[1], [0], [0], [1], [0, 0, 1, 1], [], []>} : vector<2x32xbf16>, vector<32x128xbf16>, vector<2x128xf32> -> vector<2x128xf32>
    %c0_12 = arith.constant 0 : index
    %c0_13 = arith.constant 0 : index
    %28 = vector.load %arg5[%c0_12, %c0_13] : memref<1x128xf32, #tpu.memory_space<vmem>>, vector<1x128xf32>
    %29 = vector.broadcast %28 : vector<1x128xf32> to vector<2x128xf32>
    %30 = arith.addf %27, %29 : vector<2x128xf32>
    %c0_14 = arith.constant 0 : index
    %c0_15 = arith.constant 0 : index
    %31 = vector.load %arg6[%c0_14, %c0_15] : memref<2x128xf32, #tpu.memory_space<vmem>>, vector<2x128xf32>
    tpu.vector_store %arg6[%c0_14, %c0_15], %30 {strides = array<i32>} : memref<2x128xf32, #tpu.memory_space<vmem>>, vector<2x128xf32>,
    return
  }
  func.func @transform_0(%arg0: i32) -> (i32, i32) {
    %c0_i32 = arith.constant 0 : i32
    %c0_i32_0 = arith.constant 0 : i32
    return %arg0, %c0_i32 : i32, i32
  }
  func.func @transform_1(%arg0: i32) -> (i32, i32) {
    %c0_i32 = arith.constant 0 : i32
    %c0_i32_0 = arith.constant 0 : i32
    %c0_i32_1 = arith.constant 0 : i32
    return %c0_i32, %c0_i32_0 : i32, i32
  }
  func.func @transform_2(%arg0: i32) -> (i32, i32) {
    %c0_i32 = arith.constant 0 : i32
    %c0_i32_0 = arith.constant 0 : i32
    %c0_i32_1 = arith.constant 0 : i32
    return %c0_i32, %c0_i32_0 : i32, i32
  }
  func.func @transform_3(%arg0: i32) -> (i32, i32) {
    %c0_i32 = arith.constant 0 : i32
    %c0_i32_0 = arith.constant 0 : i32
    %c0_i32_1 = arith.constant 0 : i32
    return %c0_i32, %c0_i32_0 : i32, i32
  }
  func.func @transform_4(%arg0: i32) -> (i32, i32) {
    %c0_i32 = arith.constant 0 : i32
    %c0_i32_0 = arith.constant 0 : i32
    %c0_i32_1 = arith.constant 0 : i32
    return %c0_i32, %c0_i32_0 : i32, i32
  }
  func.func @transform_5(%arg0: i32) -> (i32, i32) {
    %c0_i32 = arith.constant 0 : i32
    %c0_i32_0 = arith.constant 0 : i32
    return %arg0, %c0_i32 : i32, i32
  }
}

module attributes {stable_mosaic.version = 11 : i64} {
  func.func @_block_kernel(%arg0: i32, %arg1: memref<1x17x32xf32, #tpu.memory_space<vmem>>, %arg2: memref<1x32xf32, #tpu.memory_space<vmem>>, %arg3: memref<1x32xf32, #tpu.memory_space<vmem>>, %arg4: memref<32x96xbf16, #tpu.memory_space<vmem>>, %arg5: memref<1x96xf32, #tpu.memory_space<vmem>>, %arg6: memref<32x32xbf16, #tpu.memory_space<vmem>>, %arg7: memref<1x32xf32, #tpu.memory_space<vmem>>, %arg8: memref<1x32xf32, #tpu.memory_space<vmem>>, %arg9: memref<1x32xf32, #tpu.memory_space<vmem>>, %arg10: memref<32x128xbf16, #tpu.memory_space<vmem>>, %arg11: memref<1x128xf32, #tpu.memory_space<vmem>>, %arg12: memref<128x32xbf16, #tpu.memory_space<vmem>>, %arg13: memref<1x32xf32, #tpu.memory_space<vmem>>, %arg14: memref<1x17x32xf32, #tpu.memory_space<vmem>>) attributes {dimension_semantics = [#tpu.dimension_semantics<parallel>], iteration_bounds = array<i64: 2>, scalar_prefetch = 0 : i64, scratch_operands = 0 : i64, tpu.core_type = #tpu.core_type<tc>, window_params = [{transform_indices = @transform_0, window_bounds = array<i64: 1, 17, 32>}, {pipeline_mode = #tpu.pipeline_mode<synchronous>, transform_indices = @transform_1, window_bounds = array<i64: 1, 32>}, {pipeline_mode = #tpu.pipeline_mode<synchronous>, transform_indices = @transform_2, window_bounds = array<i64: 1, 32>}, {pipeline_mode = #tpu.pipeline_mode<synchronous>, transform_indices = @transform_3, window_bounds = array<i64: 32, 96>}, {pipeline_mode = #tpu.pipeline_mode<synchronous>, transform_indices = @transform_4, window_bounds = array<i64: 1, 96>}, {pipeline_mode = #tpu.pipeline_mode<synchronous>, transform_indices = @transform_5, window_bounds = array<i64: 32, 32>}, {pipeline_mode = #tpu.pipeline_mode<synchronous>, transform_indices = @transform_6, window_bounds = array<i64: 1, 32>}, {pipeline_mode = #tpu.pipeline_mode<synchronous>, transform_indices = @transform_7, window_bounds = array<i64: 1, 32>}, {pipeline_mode = #tpu.pipeline_mode<synchronous>, transform_indices = @transform_8, window_bounds = array<i64: 1, 32>}, {pipeline_mode = #tpu.pipeline_mode<synchronous>, transform_indices = @transform_9, window_bounds = array<i64: 32, 128>}, {pipeline_mode = #tpu.pipeline_mode<synchronous>, transform_indices = @transform_10, window_bounds = array<i64: 1, 128>}, {pipeline_mode = #tpu.pipeline_mode<synchronous>, transform_indices = @transform_11, window_bounds = array<i64: 128, 32>}, {pipeline_mode = #tpu.pipeline_mode<synchronous>, transform_indices = @transform_12, window_bounds = array<i64: 1, 32>}, {transform_indices = @transform_13, window_bounds = array<i64: 1, 17, 32>}]} {
    %c0 = arith.constant 0 : index
    %c0_0 = arith.constant 0 : index
    %c0_1 = arith.constant 0 : index
    %0 = vector.load %arg1[%c0, %c0_0, %c0_1] : memref<1x17x32xf32, #tpu.memory_space<vmem>>, vector<1x17x32xf32>
    %1 = vector.shape_cast %0 : vector<1x17x32xf32> to vector<17x32xf32>
    %c0_2 = arith.constant 0 : index
    %c0_3 = arith.constant 0 : index
    %2 = vector.load %arg2[%c0_2, %c0_3] : memref<1x32xf32, #tpu.memory_space<vmem>>, vector<1x32xf32>
    %c0_4 = arith.constant 0 : index
    %c0_5 = arith.constant 0 : index
    %3 = vector.load %arg3[%c0_4, %c0_5] : memref<1x32xf32, #tpu.memory_space<vmem>>, vector<1x32xf32>
    %cst = arith.constant dense<0.000000e+00> : vector<17xf32>
    %4 = vector.multi_reduction <add>, %1, %cst [1] : vector<17x32xf32> to vector<17xf32>
    %5 = vector.shape_cast %4 : vector<17xf32> to vector<17x1xf32>
    %cst_6 = arith.constant 3.200000e+01 : f32
    %6 = vector.broadcast %cst_6 : f32 to vector<17x1xf32>
    %7 = arith.divf %5, %6 : vector<17x1xf32>
    %8 = vector.broadcast %7 : vector<17x1xf32> to vector<17x32xf32>
    %9 = arith.subf %1, %8 : vector<17x32xf32>
    %10 = arith.mulf %9, %9 : vector<17x32xf32>
    %cst_7 = arith.constant dense<0.000000e+00> : vector<17xf32>
    %11 = vector.multi_reduction <add>, %10, %cst_7 [1] : vector<17x32xf32> to vector<17xf32>
    %12 = vector.shape_cast %11 : vector<17xf32> to vector<17x1xf32>
    %cst_8 = arith.constant 3.200000e+01 : f32
    %13 = vector.broadcast %cst_8 : f32 to vector<17x1xf32>
    %14 = arith.divf %12, %13 : vector<17x1xf32>
    %15 = vector.broadcast %7 : vector<17x1xf32> to vector<17x32xf32>
    %16 = arith.subf %1, %15 : vector<17x32xf32>
    %cst_9 = arith.constant 9.99999997E-7 : f32
    %17 = vector.broadcast %cst_9 : f32 to vector<17x1xf32>
    %18 = arith.addf %14, %17 : vector<17x1xf32>
    %19 = math.rsqrt %18 : vector<17x1xf32>
    %20 = vector.broadcast %19 : vector<17x1xf32> to vector<17x32xf32>
    %21 = arith.mulf %16, %20 : vector<17x32xf32>
    %22 = vector.broadcast %2 : vector<1x32xf32> to vector<17x32xf32>
    %23 = arith.mulf %21, %22 : vector<17x32xf32>
    %24 = vector.broadcast %3 : vector<1x32xf32> to vector<17x32xf32>
    %25 = arith.addf %23, %24 : vector<17x32xf32>
    %26 = arith.truncf %25 : vector<17x32xf32> to vector<17x32xbf16>
    %c0_10 = arith.constant 0 : index
    %c0_11 = arith.constant 0 : index
    %27 = vector.load %arg4[%c0_10, %c0_11] : memref<32x96xbf16, #tpu.memory_space<vmem>>, vector<32x96xbf16>
    %cst_12 = arith.constant dense<0.000000e+00> : vector<17x96xf32>
    %28 = tpu.matmul %26, %27, %cst_12 {dimension_numbers = #tpu.dot_dimension_numbers<[1], [0], [0], [1], [0, 0, 1, 1], [], []>} : vector<17x32xbf16>, vector<32x96xbf16>, vector<17x96xf32> -> vector<17x96xf32>
    %c0_13 = arith.constant 0 : index
    %c0_14 = arith.constant 0 : index
    %29 = vector.load %arg5[%c0_13, %c0_14] : memref<1x96xf32, #tpu.memory_space<vmem>>, vector<1x96xf32>
    %30 = vector.broadcast %29 : vector<1x96xf32> to vector<17x96xf32>
    %31 = arith.addf %28, %30 : vector<17x96xf32>
    %32 = arith.truncf %31 : vector<17x96xf32> to vector<17x96xbf16>
    %33 = vector.extract_strided_slice %32 {offsets = [0, 0], sizes = [17, 8], strides = [1, 1]} : vector<17x96xbf16> to vector<17x8xbf16>
    %34 = vector.extract_strided_slice %32 {offsets = [0, 8], sizes = [17, 8], strides = [1, 1]} : vector<17x96xbf16> to vector<17x8xbf16>
    %35 = vector.extract_strided_slice %32 {offsets = [0, 16], sizes = [17, 8], strides = [1, 1]} : vector<17x96xbf16> to vector<17x8xbf16>
    %36 = vector.extract_strided_slice %32 {offsets = [0, 24], sizes = [17, 8], strides = [1, 1]} : vector<17x96xbf16> to vector<17x8xbf16>
    %37 = vector.shape_cast %33 : vector<17x8xbf16> to vector<1x17x8xbf16>
    %38 = vector.shape_cast %34 : vector<17x8xbf16> to vector<1x17x8xbf16>
    %39 = vector.shape_cast %35 : vector<17x8xbf16> to vector<1x17x8xbf16>
    %40 = vector.shape_cast %36 : vector<17x8xbf16> to vector<1x17x8xbf16>
    %41 = tpu.concatenate %37, %38, %39, %40 in 0 : vector<1x17x8xbf16>, vector<1x17x8xbf16>, vector<1x17x8xbf16>, vector<1x17x8xbf16> -> vector<4x17x8xbf16>
    %42 = vector.extract_strided_slice %32 {offsets = [0, 32], sizes = [17, 8], strides = [1, 1]} : vector<17x96xbf16> to vector<17x8xbf16>
    %43 = vector.extract_strided_slice %32 {offsets = [0, 40], sizes = [17, 8], strides = [1, 1]} : vector<17x96xbf16> to vector<17x8xbf16>
    %44 = vector.extract_strided_slice %32 {offsets = [0, 48], sizes = [17, 8], strides = [1, 1]} : vector<17x96xbf16> to vector<17x8xbf16>
    %45 = vector.extract_strided_slice %32 {offsets = [0, 56], sizes = [17, 8], strides = [1, 1]} : vector<17x96xbf16> to vector<17x8xbf16>
    %46 = vector.shape_cast %42 : vector<17x8xbf16> to vector<1x17x8xbf16>
    %47 = vector.shape_cast %43 : vector<17x8xbf16> to vector<1x17x8xbf16>
    %48 = vector.shape_cast %44 : vector<17x8xbf16> to vector<1x17x8xbf16>
    %49 = vector.shape_cast %45 : vector<17x8xbf16> to vector<1x17x8xbf16>
    %50 = tpu.concatenate %46, %47, %48, %49 in 0 : vector<1x17x8xbf16>, vector<1x17x8xbf16>, vector<1x17x8xbf16>, vector<1x17x8xbf16> -> vector<4x17x8xbf16>
    %51 = vector.extract_strided_slice %32 {offsets = [0, 64], sizes = [17, 8], strides = [1, 1]} : vector<17x96xbf16> to vector<17x8xbf16>
    %52 = vector.extract_strided_slice %32 {offsets = [0, 72], sizes = [17, 8], strides = [1, 1]} : vector<17x96xbf16> to vector<17x8xbf16>
    %53 = vector.extract_strided_slice %32 {offsets = [0, 80], sizes = [17, 8], strides = [1, 1]} : vector<17x96xbf16> to vector<17x8xbf16>
    %54 = vector.extract_strided_slice %32 {offsets = [0, 88], sizes = [17, 8], strides = [1, 1]} : vector<17x96xbf16> to vector<17x8xbf16>
    %55 = vector.shape_cast %51 : vector<17x8xbf16> to vector<1x17x8xbf16>
    %56 = vector.shape_cast %52 : vector<17x8xbf16> to vector<1x17x8xbf16>
    %57 = vector.shape_cast %53 : vector<17x8xbf16> to vector<1x17x8xbf16>
    %58 = vector.shape_cast %54 : vector<17x8xbf16> to vector<1x17x8xbf16>
    %59 = tpu.concatenate %55, %56, %57, %58 in 0 : vector<1x17x8xbf16>, vector<1x17x8xbf16>, vector<1x17x8xbf16>, vector<1x17x8xbf16> -> vector<4x17x8xbf16>
    "tpu.trace_start"() <{level = 10 : i32, message = "hnd,hmd->hnm"}> : () -> ()
    %cst_15 = arith.constant dense<0.000000e+00> : vector<4x17x17xf32>
    %60 = tpu.matmul %41, %50, %cst_15 {dimension_numbers = #tpu.dot_dimension_numbers<[2], [2], [1], [1], [0, 0, 0, 1, 1, 1], [0], [0]>} : vector<4x17x8xbf16>, vector<4x17x8xbf16>, vector<4x17x17xf32> -> vector<4x17x17xf32>
    "tpu.trace_stop"() : () -> ()
    %cst_16 = arith.constant dense<0xFF800000> : vector<4x17xf32>
    %61 = vector.multi_reduction <maximumf>, %60, %cst_16 [2] : vector<4x17x17xf32> to vector<4x17xf32>
    %62 = vector.shape_cast %61 : vector<4x17xf32> to vector<4x17x1xf32>
    %63 = vector.broadcast %62 : vector<4x17x1xf32> to vector<4x17x17xf32>
    %64 = arith.subf %60, %63 : vector<4x17x17xf32>
    %65 = math.exp %64 : vector<4x17x17xf32>
    %cst_17 = arith.constant dense<0.000000e+00> : vector<4x17xf32>
    %66 = vector.multi_reduction <add>, %65, %cst_17 [2] : vector<4x17x17xf32> to vector<4x17xf32>
    %67 = vector.shape_cast %66 : vector<4x17xf32> to vector<4x17x1xf32>
    %68 = tpu.reciprocal %67 {approx = true} : vector<4x17x1xf32> -> vector<4x17x1xf32>
    %69 = vector.broadcast %68 : vector<4x17x1xf32> to vector<4x17x17xf32>
    %70 = arith.mulf %65, %69 : vector<4x17x17xf32>
    %71 = arith.truncf %70 : vector<4x17x17xf32> to vector<4x17x17xbf16>
    "tpu.trace_start"() <{level = 10 : i32, message = "hnm,hmd->hnd"}> : () -> ()
    %cst_18 = arith.constant dense<0.000000e+00> : vector<4x17x8xf32>
    %72 = tpu.matmul %71, %59, %cst_18 {dimension_numbers = #tpu.dot_dimension_numbers<[2], [1], [1], [2], [0, 0, 0, 1, 1, 2], [0], [0]>} : vector<4x17x17xbf16>, vector<4x17x8xbf16>, vector<4x17x8xf32> -> vector<4x17x8xf32>
    "tpu.trace_stop"() : () -> ()
    %73 = arith.truncf %72 : vector<4x17x8xf32> to vector<4x17x8xbf16>
    %74 = vector.extract_strided_slice %73 {offsets = [0, 0, 0], sizes = [1, 17, 8], strides = [1, 1, 1]} : vector<4x17x8xbf16> to vector<1x17x8xbf16>
    %75 = vector.shape_cast %74 : vector<1x17x8xbf16> to vector<17x8xbf16>
    %76 = vector.extract_strided_slice %73 {offsets = [1, 0, 0], sizes = [1, 17, 8], strides = [1, 1, 1]} : vector<4x17x8xbf16> to vector<1x17x8xbf16>
    %77 = vector.shape_cast %76 : vector<1x17x8xbf16> to vector<17x8xbf16>
    %78 = vector.extract_strided_slice %73 {offsets = [2, 0, 0], sizes = [1, 17, 8], strides = [1, 1, 1]} : vector<4x17x8xbf16> to vector<1x17x8xbf16>
    %79 = vector.shape_cast %78 : vector<1x17x8xbf16> to vector<17x8xbf16>
    %80 = vector.extract_strided_slice %73 {offsets = [3, 0, 0], sizes = [1, 17, 8], strides = [1, 1, 1]} : vector<4x17x8xbf16> to vector<1x17x8xbf16>
    %81 = vector.shape_cast %80 : vector<1x17x8xbf16> to vector<17x8xbf16>
    %82 = tpu.concatenate %75, %77, %79, %81 in 1 : vector<17x8xbf16>, vector<17x8xbf16>, vector<17x8xbf16>, vector<17x8xbf16> -> vector<17x32xbf16>
    %c0_19 = arith.constant 0 : index
    %c0_20 = arith.constant 0 : index
    %83 = vector.load %arg6[%c0_19, %c0_20] : memref<32x32xbf16, #tpu.memory_space<vmem>>, vector<32x32xbf16>
    %cst_21 = arith.constant dense<0.000000e+00> : vector<17x32xf32>
    %84 = tpu.matmul %82, %83, %cst_21 {dimension_numbers = #tpu.dot_dimension_numbers<[1], [0], [0], [1], [0, 0, 1, 1], [], []>} : vector<17x32xbf16>, vector<32x32xbf16>, vector<17x32xf32> -> vector<17x32xf32>
    %c0_22 = arith.constant 0 : index
    %c0_23 = arith.constant 0 : index
    %85 = vector.load %arg7[%c0_22, %c0_23] : memref<1x32xf32, #tpu.memory_space<vmem>>, vector<1x32xf32>
    %86 = vector.broadcast %85 : vector<1x32xf32> to vector<17x32xf32>
    %87 = arith.addf %84, %86 : vector<17x32xf32>
    %88 = arith.addf %1, %87 : vector<17x32xf32>
    %c0_24 = arith.constant 0 : index
    %c0_25 = arith.constant 0 : index
    %89 = vector.load %arg8[%c0_24, %c0_25] : memref<1x32xf32, #tpu.memory_space<vmem>>, vector<1x32xf32>
    %c0_26 = arith.constant 0 : index
    %c0_27 = arith.constant 0 : index
    %90 = vector.load %arg9[%c0_26, %c0_27] : memref<1x32xf32, #tpu.memory_space<vmem>>, vector<1x32xf32>
    %cst_28 = arith.constant dense<0.000000e+00> : vector<17xf32>
    %91 = vector.multi_reduction <add>, %88, %cst_28 [1] : vector<17x32xf32> to vector<17xf32>
    %92 = vector.shape_cast %91 : vector<17xf32> to vector<17x1xf32>
    %cst_29 = arith.constant 3.200000e+01 : f32
    %93 = vector.broadcast %cst_29 : f32 to vector<17x1xf32>
    %94 = arith.divf %92, %93 : vector<17x1xf32>
    %95 = vector.broadcast %94 : vector<17x1xf32> to vector<17x32xf32>
    %96 = arith.subf %88, %95 : vector<17x32xf32>
    %97 = arith.mulf %96, %96 : vector<17x32xf32>
    %cst_30 = arith.constant dense<0.000000e+00> : vector<17xf32>
    %98 = vector.multi_reduction <add>, %97, %cst_30 [1] : vector<17x32xf32> to vector<17xf32>
    %99 = vector.shape_cast %98 : vector<17xf32> to vector<17x1xf32>
    %cst_31 = arith.constant 3.200000e+01 : f32
    %100 = vector.broadcast %cst_31 : f32 to vector<17x1xf32>
    %101 = arith.divf %99, %100 : vector<17x1xf32>
    %102 = vector.broadcast %94 : vector<17x1xf32> to vector<17x32xf32>
    %103 = arith.subf %88, %102 : vector<17x32xf32>
    %cst_32 = arith.constant 9.99999997E-7 : f32
    %104 = vector.broadcast %cst_32 : f32 to vector<17x1xf32>
    %105 = arith.addf %101, %104 : vector<17x1xf32>
    %106 = math.rsqrt %105 : vector<17x1xf32>
    %107 = vector.broadcast %106 : vector<17x1xf32> to vector<17x32xf32>
    %108 = arith.mulf %103, %107 : vector<17x32xf32>
    %109 = vector.broadcast %89 : vector<1x32xf32> to vector<17x32xf32>
    %110 = arith.mulf %108, %109 : vector<17x32xf32>
    %111 = vector.broadcast %90 : vector<1x32xf32> to vector<17x32xf32>
    %112 = arith.addf %110, %111 : vector<17x32xf32>
    %113 = arith.truncf %112 : vector<17x32xf32> to vector<17x32xbf16>
    %c0_33 = arith.constant 0 : index
    %c0_34 = arith.constant 0 : index
    %114 = vector.load %arg10[%c0_33, %c0_34] : memref<32x128xbf16, #tpu.memory_space<vmem>>, vector<32x128xbf16>
    %cst_35 = arith.constant dense<0.000000e+00> : vector<17x128xf32>
    %115 = tpu.matmul %113, %114, %cst_35 {dimension_numbers = #tpu.dot_dimension_numbers<[1], [0], [0], [1], [0, 0, 1, 1], [], []>} : vector<17x32xbf16>, vector<32x128xbf16>, vector<17x128xf32> -> vector<17x128xf32>
    %c0_36 = arith.constant 0 : index
    %c0_37 = arith.constant 0 : index
    %116 = vector.load %arg11[%c0_36, %c0_37] : memref<1x128xf32, #tpu.memory_space<vmem>>, vector<1x128xf32>
    %117 = vector.broadcast %116 : vector<1x128xf32> to vector<17x128xf32>
    %118 = arith.addf %115, %117 : vector<17x128xf32>
    %cst_38 = arith.constant 5.000000e-01 : f32
    %119 = vector.broadcast %cst_38 : f32 to vector<17x128xf32>
    %120 = arith.mulf %119, %118 : vector<17x128xf32>
    %cst_39 = arith.constant 4.471500e-02 : f32
    %121 = vector.broadcast %cst_39 : f32 to vector<17x128xf32>
    %122 = arith.mulf %121, %118 : vector<17x128xf32>
    %123 = arith.mulf %122, %118 : vector<17x128xf32>
    %124 = arith.mulf %123, %118 : vector<17x128xf32>
    %125 = arith.addf %118, %124 : vector<17x128xf32>
    %cst_40 = arith.constant 0.797884583 : f32
    %126 = vector.broadcast %cst_40 : f32 to vector<17x128xf32>
    %127 = arith.mulf %126, %125 : vector<17x128xf32>
    %128 = math.tanh %127 : vector<17x128xf32>
    %cst_41 = arith.constant 1.000000e+00 : f32
    %129 = vector.broadcast %cst_41 : f32 to vector<17x128xf32>
    %130 = arith.addf %129, %128 : vector<17x128xf32>
    %131 = arith.mulf %120, %130 : vector<17x128xf32>
    %132 = arith.truncf %131 : vector<17x128xf32> to vector<17x128xbf16>
    %c0_42 = arith.constant 0 : index
    %c0_43 = arith.constant 0 : index
    %133 = vector.load %arg12[%c0_42, %c0_43] : memref<128x32xbf16, #tpu.memory_space<vmem>>, vector<128x32xbf16>
    %cst_44 = arith.constant dense<0.000000e+00> : vector<17x32xf32>
    %134 = tpu.matmul %132, %133, %cst_44 {dimension_numbers = #tpu.dot_dimension_numbers<[1], [0], [0], [1], [0, 0, 1, 1], [], []>} : vector<17x128xbf16>, vector<128x32xbf16>, vector<17x32xf32> -> vector<17x32xf32>
    %c0_45 = arith.constant 0 : index
    %c0_46 = arith.constant 0 : index
    %135 = vector.load %arg13[%c0_45, %c0_46] : memref<1x32xf32, #tpu.memory_space<vmem>>, vector<1x32xf32>
    %136 = vector.broadcast %135 : vector<1x32xf32> to vector<17x32xf32>
    %137 = arith.addf %134, %136 : vector<17x32xf32>
    %138 = arith.addf %88, %137 : vector<17x32xf32>
    %c0_47 = arith.constant 0 : index
    %c0_48 = arith.constant 0 : index
    %c0_49 = arith.constant 0 : index
    %139 = vector.load %arg14[%c0_47, %c0_48, %c0_49] : memref<1x17x32xf32, #tpu.memory_space<vmem>>, vector<1x17x32xf32>
    %140 = vector.shape_cast %139 : vector<1x17x32xf32> to vector<17x32xf32>
    %141 = vector.shape_cast %138 : vector<17x32xf32> to vector<1x17x32xf32>
    tpu.vector_store %arg14[%c0_47, %c0_48, %c0_49], %141 {strides = array<i32>} : memref<1x17x32xf32, #tpu.memory_space<vmem>>, vector<1x17x32xf32>,
    return
  }
  func.func @transform_0(%arg0: i32) -> (i32, i32, i32) {
    %c0_i32 = arith.constant 0 : i32
    %c0_i32_0 = arith.constant 0 : i32
    %c0_i32_1 = arith.constant 0 : i32
    return %arg0, %c0_i32, %c0_i32_0 : i32, i32, i32
  }
  func.func @transform_1(%arg0: i32) -> (i32, i32) {
    %c0_i32 = arith.constant 0 : i32
    %c0_i32_0 = arith.constant 0 : i32
    %c0_i32_1 = arith.constant 0 : i32
    return %c0_i32, %c0_i32_0 : i32, i32
  }
  func.func @transform_2(%arg0: i32) -> (i32, i32) {
    %c0_i32 = arith.constant 0 : i32
    %c0_i32_0 = arith.constant 0 : i32
    %c0_i32_1 = arith.constant 0 : i32
    return %c0_i32, %c0_i32_0 : i32, i32
  }
  func.func @transform_3(%arg0: i32) -> (i32, i32) {
    %c0_i32 = arith.constant 0 : i32
    %c0_i32_0 = arith.constant 0 : i32
    %c0_i32_1 = arith.constant 0 : i32
    return %c0_i32, %c0_i32_0 : i32, i32
  }
  func.func @transform_4(%arg0: i32) -> (i32, i32) {
    %c0_i32 = arith.constant 0 : i32
    %c0_i32_0 = arith.constant 0 : i32
    %c0_i32_1 = arith.constant 0 : i32
    return %c0_i32, %c0_i32_0 : i32, i32
  }
  func.func @transform_5(%arg0: i32) -> (i32, i32) {
    %c0_i32 = arith.constant 0 : i32
    %c0_i32_0 = arith.constant 0 : i32
    %c0_i32_1 = arith.constant 0 : i32
    return %c0_i32, %c0_i32_0 : i32, i32
  }
  func.func @transform_6(%arg0: i32) -> (i32, i32) {
    %c0_i32 = arith.constant 0 : i32
    %c0_i32_0 = arith.constant 0 : i32
    %c0_i32_1 = arith.constant 0 : i32
    return %c0_i32, %c0_i32_0 : i32, i32
  }
  func.func @transform_7(%arg0: i32) -> (i32, i32) {
    %c0_i32 = arith.constant 0 : i32
    %c0_i32_0 = arith.constant 0 : i32
    %c0_i32_1 = arith.constant 0 : i32
    return %c0_i32, %c0_i32_0 : i32, i32
  }
  func.func @transform_8(%arg0: i32) -> (i32, i32) {
    %c0_i32 = arith.constant 0 : i32
    %c0_i32_0 = arith.constant 0 : i32
    %c0_i32_1 = arith.constant 0 : i32
    return %c0_i32, %c0_i32_0 : i32, i32
  }
  func.func @transform_9(%arg0: i32) -> (i32, i32) {
    %c0_i32 = arith.constant 0 : i32
    %c0_i32_0 = arith.constant 0 : i32
    %c0_i32_1 = arith.constant 0 : i32
    return %c0_i32, %c0_i32_0 : i32, i32
  }
  func.func @transform_10(%arg0: i32) -> (i32, i32) {
    %c0_i32 = arith.constant 0 : i32
    %c0_i32_0 = arith.constant 0 : i32
    %c0_i32_1 = arith.constant 0 : i32
    return %c0_i32, %c0_i32_0 : i32, i32
  }
  func.func @transform_11(%arg0: i32) -> (i32, i32) {
    %c0_i32 = arith.constant 0 : i32
    %c0_i32_0 = arith.constant 0 : i32
    %c0_i32_1 = arith.constant 0 : i32
    return %c0_i32, %c0_i32_0 : i32, i32
  }
  func.func @transform_12(%arg0: i32) -> (i32, i32) {
    %c0_i32 = arith.constant 0 : i32
    %c0_i32_0 = arith.constant 0 : i32
    %c0_i32_1 = arith.constant 0 : i32
    return %c0_i32, %c0_i32_0 : i32, i32
  }
  func.func @transform_13(%arg0: i32) -> (i32, i32, i32) {
    %c0_i32 = arith.constant 0 : i32
    %c0_i32_0 = arith.constant 0 : i32
    %c0_i32_1 = arith.constant 0 : i32
    return %arg0, %c0_i32, %c0_i32_0 : i32, i32, i32
  }
}

</mosaic_0001>

<llo_original>
// kernel: vit_forward.4
$region0: #{vit_forward.4}
  #allocation0 [shape = 'u32[]', space=smem, size = 0x4, offset = 0x4, fixed_abs, tag = 'smem constant byte address 0x4 - core index']
  #allocation1 [shape = 'u32[72,128]{1,0:T(1,128)}', space=vmem, size = 0x9000, scoped, tag = 'internal scratch']
  %s0 = inlined_call_operand.vmem [shape: f32[2,16,48], index: 0, kind: input, shape index: {}]
  %s1 = inlined_call_operand.vmem [shape: bf16[48,32], index: 1, kind: input, shape index: {}]
  %s2 = inlined_call_operand.vmem [shape: f32[1,32], index: 2, kind: input, shape index: {}]
  %s3 = inlined_call_operand.vmem [shape: f32[1,32], index: 3, kind: input, shape index: {}]
  %s4 = inlined_call_operand.vmem [shape: f32[17,32], index: 4, kind: input, shape index: {}]
  %s5 = inlined_call_operand.vmem [shape: f32[2,17,32], index: 5, kind: output, shape index: {}]
  %s6 = sld [smem:[#allocation0]]
  $region53: #{vit_forward.4} parent=0
    _
  %s8 = ssub.s32 1, %s6
  %s9 = scalar_select 0, %s8, %s6
  loop: start=0, step=1, limit=4
  $region2: #{vit_forward.4} parent=0 // loop_pre_header
    _
  $region3: #{vit_forward.4} parent=0 // loop_header
    %s11 = sphi 0, %s15
    %p12 = scmp.ge.s32.totalorder %s11, 4
    %s21 = sphi 0, %s23
    %s24 = sphi 0, %s21
    %s25 = sphi 0, %s24
    %s41 = sphi 0, %s25
    %s45 = sphi 0, %s45
    %s47 = sphi 0, %s45
    %s48 = sphi 0, %s47
    %s62 = sphi 0, %s48
    %s66 = sphi 0, %s66
    %s68 = sphi 0, %s66
    %s69 = sphi 0, %s68
    %s83 = sphi 0, %s69
    %s87 = sphi 0, %s87
    %s89 = sphi 0, %s87
    %s90 = sphi 0, %s89
    %s104 = sphi 0, %s90
    %s108 = sphi 0, %s108
    %s110 = sphi 0, %s108
    %s111 = sphi 0, %s110
    %s125 = sphi 0, %s111
    %s131 = sphi 0, %s133
    %s134 = sphi 0, %s131
    %s135 = sphi 0, %s134
    %s151 = sphi 0, %s135
  $region4: #{vit_forward.4} parent=0 // loop_header_branch
    %14 = sbr.rel (%p12) target = $region8
  $region5: #{vit_forward.4} parent=0 // loop_body
    %s16 = ssub.s32 %s11, 1
    %s17 = ssub.s32 %s11, 2
    %s18 = sadd.s32 %s11, 1
    %s19 = ssub.s32 %s11, %s18
    %p20 = scmp.eq.s32.totalorder %s19, 0
    %s22 = sadd.s32 %s21, 1
    %s23 = scalar_select %p20, %s21, %s22
    %p26 = pneg %p20
    %p27 = scmp.eq.s32.totalorder %s11, 1
    %p28 = por %p26, %p27
    %p29 = scmp.ne.s32.totalorder %s21, %s24
    %p30 = scmp.eq.s32.totalorder %s11, 0
    %p31 = por %p29, %p30
    %p32 = scmp.ne.s32.totalorder %s21, %s24
    %p33 = scmp.eq.s32.totalorder %s16, 1
    %p34 = por %p32, %p33
    %p35 = scmp.ne.s32.totalorder %s24, %s25
    %p36 = scmp.eq.s32.totalorder %s16, 0
    %p37 = por %p35, %p36
    %p38 = scmp.ne.s32.totalorder %s24, %s25
    %p39 = scmp.eq.s32.totalorder %s17, 1
    %p40 = por %p38, %p39
    %p42 = scmp.ne.s32.totalorder %s25, %s41
    %p43 = scmp.eq.s32.totalorder %s17, 0
    %p44 = por %p42, %p43
    %s46 = sadd.s32 %s45, 1
    %p49 = scmp.eq.s32.totalorder %s11, 1
    %p50 = scmp.ne.s32.totalorder %s45, %s47
    %p51 = scmp.eq.s32.totalorder %s11, 0
    %p52 = por %p50, %p51
    %p53 = scmp.ne.s32.totalorder %s45, %s47
    %p54 = scmp.eq.s32.totalorder %s16, 1
    %p55 = por %p53, %p54
    %p56 = scmp.ne.s32.totalorder %s47, %s48
    %p57 = scmp.eq.s32.totalorder %s16, 0
    %p58 = por %p56, %p57
    %p59 = scmp.ne.s32.totalorder %s47, %s48
    %p60 = scmp.eq.s32.totalorder %s17, 1
    %p61 = por %p59, %p60
    %p63 = scmp.ne.s32.totalorder %s48, %s62
    %p64 = scmp.eq.s32.totalorder %s17, 0
    %p65 = por %p63, %p64
    %s67 = sadd.s32 %s66, 1
    %p70 = scmp.eq.s32.totalorder %s11, 1
    %p71 = scmp.ne.s32.totalorder %s66, %s68
    %p72 = scmp.eq.s32.totalorder %s11, 0
    %p73 = por %p71, %p72
    %p74 = scmp.ne.s32.totalorder %s66, %s68
    %p75 = scmp.eq.s32.totalorder %s16, 1
    %p76 = por %p74, %p75
    %p77 = scmp.ne.s32.totalorder %s68, %s69
    %p78 = scmp.eq.s32.totalorder %s16, 0
    %p79 = por %p77, %p78
    %p80 = scmp.ne.s32.totalorder %s68, %s69
    %p81 = scmp.eq.s32.totalorder %s17, 1
    %p82 = por %p80, %p81
    %p84 = scmp.ne.s32.totalorder %s69, %s83
    %p85 = scmp.eq.s32.totalorder %s17, 0
    %p86 = por %p84, %p85
    %s88 = sadd.s32 %s87, 1
    %p91 = scmp.eq.s32.totalorder %s11, 1
    %p92 = scmp.ne.s32.totalorder %s87, %s89
    %p93 = scmp.eq.s32.totalorder %s11, 0
    %p94 = por %p92, %p93
    %p95 = scmp.ne.s32.totalorder %s87, %s89
    %p96 = scmp.eq.s32.totalorder %s16, 1
    %p97 = por %p95, %p96
    %p98 = scmp.ne.s32.totalorder %s89, %s90
    %p99 = scmp.eq.s32.totalorder %s16, 0
    %p100 = por %p98, %p99
    %p101 = scmp.ne.s32.totalorder %s89, %s90
    %p102 = scmp.eq.s32.totalorder %s17, 1
    %p103 = por %p101, %p102
    %p105 = scmp.ne.s32.totalorder %s90, %s104
    %p106 = scmp.eq.s32.totalorder %s17, 0
    %p107 = por %p105, %p106
    %s109 = sadd.s32 %s108, 1
    %p112 = scmp.eq.s32.totalorder %s11, 1
    %p113 = scmp.ne.s32.totalorder %s108, %s110
    %p114 = scmp.eq.s32.totalorder %s11, 0
    %p115 = por %p113, %p114
    %p116 = scmp.ne.s32.totalorder %s108, %s110
    %p117 = scmp.eq.s32.totalorder %s16, 1
    %p118 = por %p116, %p117
    %p119 = scmp.ne.s32.totalorder %s110, %s111
    %p120 = scmp.eq.s32.totalorder %s16, 0
    %p121 = por %p119, %p120
    %p122 = scmp.ne.s32.totalorder %s110, %s111
    %p123 = scmp.eq.s32.totalorder %s17, 1
    %p124 = por %p122, %p123
    %p126 = scmp.ne.s32.totalorder %s111, %s125
    %p127 = scmp.eq.s32.totalorder %s17, 0
    %p128 = por %p126, %p127
    %s129 = ssub.s32 %s11, %s18
    %p130 = scmp.eq.s32.totalorder %s129, 0
    %s132 = sadd.s32 %s131, 1
    %s133 = scalar_select %p130, %s131, %s132
    %p136 = pneg %p130
    %p137 = scmp.eq.s32.totalorder %s11, 1
    %p138 = por %p136, %p137
    %p139 = scmp.ne.s32.totalorder %s131, %s134
    %p140 = scmp.eq.s32.totalorder %s11, 0
    %p141 = por %p139, %p140
    %p142 = scmp.ne.s32.totalorder %s131, %s134
    %p143 = scmp.eq.s32.totalorder %s16, 1
    %p144 = por %p142, %p143
    %p145 = scmp.ne.s32.totalorder %s134, %s135
    %p146 = scmp.eq.s32.totalorder %s16, 0
    %p147 = por %p145, %p146
    %p148 = scmp.ne.s32.totalorder %s134, %s135
    %p149 = scmp.eq.s32.totalorder %s17, 1
    %p150 = por %p148, %p149
    %p152 = scmp.ne.s32.totalorder %s135, %s151
    %p153 = scmp.eq.s32.totalorder %s17, 0
    %p154 = por %p152, %p153
    %p155 = scmp.le.s32.totalorder 1, %s11
    %p156 = scmp.lt.s32.totalorder %s11, 3
    %p157 = pnand %p155, %p156
    %p158 = pneg %p157
    // Predicated region
    $region9: #{vit_forward.4} parent=5 // pred_check
      _
    $region10: #{vit_forward.4} parent=5 // pred_check_branch
      %160 = sbr.rel (%p157) target = $region12
    $region11: #{vit_forward.4} parent=5 // pred_region
      %s161 = ssub.s32 %s11, 1
      // Predicated region
      $region13: #{vit_forward.4} parent=11 // pred_check
        %p162 = pneg %p58
      $region14: #{vit_forward.4} parent=11 // pred_check_branch
        %164 = sbr.rel (%p162) target = $region16
      $region15: #{vit_forward.4} parent=11 // pred_region
        _
      $region16: #{vit_forward.4} parent=11 // pred_fallthru
        _
      // Predicated region
      $region17: #{vit_forward.4} parent=11 // pred_check
        %p165 = pneg %p79
      $region18: #{vit_forward.4} parent=11 // pred_check_branch
        %167 = sbr.rel (%p165) target = $region20
      $region19: #{vit_forward.4} parent=11 // pred_region
        _
      $region20: #{vit_forward.4} parent=11 // pred_fallthru
        _
      // Predicated region
      $region21: #{vit_forward.4} parent=11 // pred_check
        %p168 = pneg %p100
      $region22: #{vit_forward.4} parent=11 // pred_check_branch
        %170 = sbr.rel (%p168) target = $region24
      $region23: #{vit_forward.4} parent=11 // pred_region
        _
      $region24: #{vit_forward.4} parent=11 // pred_fallthru
        _
      // Predicated region
      $region25: #{vit_forward.4} parent=11 // pred_check
        %p171 = pneg %p121
      $region26: #{vit_forward.4} parent=11 // pred_check_branch
        %173 = sbr.rel (%p171) target = $region28
      $region27: #{vit_forward.4} parent=11 // pred_region
        _
      $region28: #{vit_forward.4} parent=11 // pred_fallthru
        _
    $region12: #{vit_forward.4} parent=5 // pred_fallthru
      _
    %p174 = scmp.lt.s32.totalorder %s11, 2
    // Predicated region
    $region29: #{vit_forward.4} parent=5 // pred_check
      %p175 = pneg %p174
    $region30: #{vit_forward.4} parent=5 // pred_check_branch
      %177 = sbr.rel (%p175) target = $region32
    $region31: #{vit_forward.4} parent=5 // pred_region
      // Predicated region
      $region33: #{vit_forward.4} parent=31 // pred_check
        %p178 = pneg %p31
      $region34: #{vit_forward.4} parent=31 // pred_check_branch
        %180 = sbr.rel (%p178) target = $region36
      $region35: #{vit_forward.4} parent=31 // pred_region
        %p181 = scmp.lt.s32.totalorder %s11, 1
        %s182 = scalar_select %p181, %s11, 1
        %s183 = smul.addr %s182, 2
        %s184 = smul.addr %s183, 8
        %s185 = scalar_lea.vmem %s0, %s184
      $region36: #{vit_forward.4} parent=31 // pred_fallthru
        _
    $region32: #{vit_forward.4} parent=5 // pred_fallthru
      _
    %p186 = scmp.le.s32.totalorder 1, %s11
    %p187 = scmp.lt.s32.totalorder %s11, 3
    %p188 = pnand %p186, %p187
    %p189 = pneg %p188
    // Predicated region
    $region37: #{vit_forward.4} parent=5 // pred_check
      _
    $region38: #{vit_forward.4} parent=5 // pred_check_branch
      %191 = sbr.rel (%p188) target = $region40
    $region39: #{vit_forward.4} parent=5 // pred_region
      %s192 = ssub.s32 %s11, 1
      %p193 = scmp.lt.s32.totalorder %s16, 1
      %s194 = scalar_select %p193, %s16, 1
      %s195 = smul.addr %s194, 2
      %s196 = smul.addr %s195, 8
      %s197 = scalar_lea.vmem %s0, %s196
      %p198 = pneg %p37
      %p199 = pneg %p34
      %p200 = pneg %p58
      %p201 = pneg %p55
      %p202 = pneg %p79
      %p203 = pneg %p76
      %p204 = pneg %p100
      %p205 = pneg %p97
      %p206 = pneg %p121
      %p207 = pneg %p118
      %p208 = pneg %p147
      %p209 = pneg %p144
      %p210 = scmp.lt.s32.totalorder %s16, 1
      %s211 = scalar_select %p210, %s16, 1
      %s212 = smul.addr %s211, 3
      %s213 = smul.addr %s212, 8
      %s214 = scalar_lea.vmem %s5, %s213
      %p215 = scmp.lt.s32.totalorder %s16, 1
      %s216 = scalar_select %p215, %s16, 1
      %s217 = smul.addr %s216, 2
      %s218 = smul.addr %s217, 8
      %s219 = scalar_lea.vmem %s0, %s218
      %p220 = scmp.lt.s32.totalorder %s16, 1
      %s221 = scalar_select %p220, %s16, 1
      %s222 = smul.addr %s221, 3
      %s223 = smul.addr %s222, 8
      %s224 = scalar_lea.vmem %s5, %s223
      %v226 = vld [vmem:[%s219] sm:$0xff]
      %v227 = vld [vmem:[%s219 + $0x8] sm:$0xff]
      %v228 = vpack.c.bf16 %v227, %v226
      %v229 = vld [vmem:[%s1] sm:$0xf]
      %v230 = vld [vmem:[%s1 + $0x4] sm:$0xf]
      %v231 = vld [vmem:[%s1 + $0x8] sm:$0xf]
      %v232 = vld [vmem:[%s1 + $0xc] sm:$0xf]
      %v233 = vld [vmem:[%s1 + $0x10] sm:$0xf]
      %v234 = vld [vmem:[%s1 + $0x14] sm:$0xf]
      %v235 = vld [vmem:[%s2] sm:$0x1]
      %v237 = vperm.slane %v235, 0
      %v245 = vunpack.c.l.b16 %v229
      %v246 = vunpack.c.l.b16 %v230
      %v247 = vunpack.c.l.b16 %v231
      %v248 = vunpack.c.l.b16 %v232
      %v249 = vunpack.c.l.b16 %v233
      %v250 = vunpack.c.l.b16 %v234
      %v251 = vpack.c.b16 %v246, %v245
      %v252 = vpack.c.b16 %v248, %v247
      %v253 = vpack.c.b16 %v250, %v249
      %vm257 = vcmask 392192
      %v259 = vsel %vm257, %v228, 0
      %261 = vmatpush.bf16.msra.mxu0 0
      %262 = vmatpush.bf16.msra.mxu0 0
      %263 = vmatpush.bf16.msra.mxu0 0
      %264 = vmatpush.bf16.msra.mxu0 0
      %265 = vmatpush.bf16.msra.mxu0 0
      %266 = vmatpush.bf16.msra.mxu0 %v253
      %267 = vmatpush.bf16.msra.mxu0 %v252
      %268 = vmatpush.bf16.msra.mxu0 %v251
      %269 = vmatmul.bf16.gmra.mxu0 %v259
      %v270 = vpop.f32.mrf.mxu0
      %v271 = vadd.f32 %v237, %v270
      %v272 = vpop.f32.mrf.mxu0
      %v273 = vadd.f32 %v237, %v272
      %274 = vdwg.mxu0
      %v275 = vld [vmem:[%s4] sm:$0xff]
      %v276 = vld [vmem:[%s4 + $0x8] sm:$0xff]
      %v277 = vadd.f32 %v271, %v275
      %v278 = vadd.f32 %v273, %v276
      %vm279 = vcmask 261120
      %280 = vst.msk [vmem:[%s224] sm:$0xff] %vm279, %v277
      %281 = vst.msk [vmem:[%s224 + $0x8] sm:$0xff] %vm279, %v278
      %v282 = vld [vmem:[%s3] sm:$0x1]
      %v283 = vld [vmem:[%s4 + $0x10] sm:$0x1]
      %v284 = vadd.f32 %v282, %v283
      %vm285 = vcmask 253952
      %286 = vst.msk [vmem:[%s224 + $0x10] sm:$0x1] %vm285, %v284
      %p287 = scmp.lt.s32.totalorder %s16, 1
      %s288 = scalar_select %p287, %s16, 1
      %s289 = smul.addr %s288, 3
      %s290 = smul.addr %s289, 8
      %s291 = scalar_lea.vmem %s5, %s290
      // Predicated region
      $region41: #{vit_forward.4} parent=39 // pred_check
        %p292 = pneg %p144
      $region42: #{vit_forward.4} parent=39 // pred_check_branch
        %294 = sbr.rel (%p292) target = $region44
      $region43: #{vit_forward.4} parent=39 // pred_region
        _
      $region44: #{vit_forward.4} parent=39 // pred_fallthru
        _
    $region40: #{vit_forward.4} parent=5 // pred_fallthru
      _
    %p295 = scmp.le.s32.totalorder 2, %s11
    // Predicated region
    $region45: #{vit_forward.4} parent=5 // pred_check
      %p296 = pneg %p295
    $region46: #{vit_forward.4} parent=5 // pred_check_branch
      %298 = sbr.rel (%p296) target = $region48
    $region47: #{vit_forward.4} parent=5 // pred_region
      %s299 = ssub.s32 %s11, 2
      // Predicated region
      $region49: #{vit_forward.4} parent=47 // pred_check
        %p300 = pneg %p150
      $region50: #{vit_forward.4} parent=47 // pred_check_branch
        %302 = sbr.rel (%p300) target = $region52
      $region51: #{vit_forward.4} parent=47 // pred_region
        %p303 = scmp.lt.s32.totalorder %s17, 1
        %s304 = scalar_select %p303, %s17, 1
        %s305 = smul.addr %s304, 3
        %s306 = smul.addr %s305, 8
        %s307 = scalar_lea.vmem %s5, %s306
      $region52: #{vit_forward.4} parent=47 // pred_fallthru
        _
    $region48: #{vit_forward.4} parent=5 // pred_fallthru
      _
  $region6: #{vit_forward.4} parent=0 // loop_footer
    %s15 = sadd.s32 1, %s11
  $region7: #{vit_forward.4} parent=0 // loop_footer_branch
    %10 = sbr.rel target = $region3
  $region8: #{vit_forward.4} parent=0 // loop_exit
    _

// kernel: vit_forward.7
$region0: #{vit_forward.7}
  #allocation0 [shape = 'u32[]', space=smem, size = 0x4, offset = 0x4, fixed_abs, tag = 'smem constant byte address 0x4 - core index']
  #allocation1 [shape = 'u32[72,128]{1,0:T(1,128)}', space=vmem, size = 0x9000, scoped, tag = 'internal scratch']
  %s0 = inlined_call_operand.vmem [shape: f32[2,32], index: 0, kind: input, shape index: {}]
  %s1 = inlined_call_operand.vmem [shape: f32[1,32], index: 1, kind: input, shape index: {}]
  %s2 = inlined_call_operand.vmem [shape: f32[1,32], index: 2, kind: input, shape index: {}]
  %s3 = inlined_call_operand.vmem [shape: bf16[32,128], index: 3, kind: input, shape index: {}]
  %s4 = inlined_call_operand.vmem [shape: f32[1,128], index: 4, kind: input, shape index: {}]
  %s5 = inlined_call_operand.hbm [shape: f32[2,128], index: 5, kind: output, shape index: {}]
  %s6 = sld [smem:[#allocation0]]
  $region30: #{vit_forward.7} parent=0
    _
  %s8 = ssub.s32 1, %s6
  %s9 = scalar_select 0, %s8, %s6
  $region1: #{vit_forward.7} parent=0
    #allocation2 [shape = 'u8[1024]{0}', space=vmem, size = 0x400, scoped, tag = 'output window, operand 0, single buffered']
    #allocation3 [shape = 's32[1]{0}', space=sflag, size = 0x4, scoped, tag = 'scoped memory for vit_forward.7']
    %10 = vsyncpa [#allocation3], 0
    // Predicated region
    $region2: #{vit_forward.7} parent=1 // pred_check
      _
    $region3: #{vit_forward.7} parent=1 // pred_check_branch
      %12 = sbr.rel (0) target = $region5
    $region4: #{vit_forward.7} parent=1 // pred_region
      _
    $region5: #{vit_forward.7} parent=1 // pred_fallthru
      _
    // Predicated region
    $region6: #{vit_forward.7} parent=1 // pred_check
      _
    $region7: #{vit_forward.7} parent=1 // pred_check_branch
      %14 = sbr.rel (0) target = $region9
    $region8: #{vit_forward.7} parent=1 // pred_region
      _
    $region9: #{vit_forward.7} parent=1 // pred_fallthru
      _
    // Predicated region
    $region10: #{vit_forward.7} parent=1 // pred_check
      _
    $region11: #{vit_forward.7} parent=1 // pred_check_branch
      %16 = sbr.rel (0) target = $region13
    $region12: #{vit_forward.7} parent=1 // pred_region
      _
    $region13: #{vit_forward.7} parent=1 // pred_fallthru
      _
    // Predicated region
    $region14: #{vit_forward.7} parent=1 // pred_check
      _
    $region15: #{vit_forward.7} parent=1 // pred_check_branch
      %18 = sbr.rel (0) target = $region17
    $region16: #{vit_forward.7} parent=1 // pred_region
      _
    $region17: #{vit_forward.7} parent=1 // pred_fallthru
      _
    // Predicated region
    $region18: #{vit_forward.7} parent=1 // pred_check
      _
    $region19: #{vit_forward.7} parent=1 // pred_check_branch
      %20 = sbr.rel (0) target = $region21
    $region20: #{vit_forward.7} parent=1 // pred_region
      _
    $region21: #{vit_forward.7} parent=1 // pred_fallthru
      _
    %v22 = vld [vmem:[%s0] sm:$0x3]
    %v23 = vld [vmem:[%s1] sm:$0x1]
    %v24 = vld [vmem:[%s2] sm:$0x1]
    %vm25 = vcmask 254976
    %v26 = vsel %vm25, %v22, 0.0
    %27 = vadd.xlane.f32.xlu0 %v26
    %v28 = vpop.xlane.xlu0 %27
    %v29 = vrcp.pop 32.0
    %v30 = vmul.f32 32.0, %v29
    %v31 = vsub.f32 1.0, %v30
    %v32 = vmul.f32 %v29, %v31
    %v33 = vadd.f32 %v29, %v32
    %vm34 = vweird.f32 %v29
    %v35 = vsel %vm34, %v29, %v33
    %v36 = vmul.f32 %v28, %v35
    %v37 = vsub.f32 %v22, %v36
    %v38 = vmul.f32 %v37, %v37
    %v39 = vsel %vm25, %v38, 0.0
    %40 = vadd.xlane.f32.xlu0 %v39
    %v41 = vpop.xlane.xlu0 %40
    %v42 = vmul.f32 %v41, %v35
    %v43 = vadd.f32 %v42, 1e-06
    %v44 = vrsqrt.pop %v43
    %v45 = vmul.f32 %v44, %v43
    %v46 = vmul.f32 %v45, %v44
    %v47 = vmul.f32 0.5, %v46
    %v48 = vsub.f32 1.5, %v47
    %v49 = vmul.f32 %v44, %v48
    %vm50 = vweird.f32 %v43
    %vm51 = vweird.f32 %v44
    %vm52 = vmor %vm50, %vm51
    %v53 = vsel %vm52, %v44, %v49
    %v54 = vmul.f32 %v37, %v53
    %v56 = vperm.slane %v23, 0
    %v58 = vmul.f32 %v54, %v56
    %v60 = vperm.slane %v24, 0
    %v62 = vadd.f32 %v58, %v60
    %v63 = vpack.c.bf16 %v62, %v62
    %v64 = vld [vmem:[%s3] sm:$0xf]
    %v65 = vld [vmem:[%s3 + $0x4] sm:$0xf]
    %v66 = vld [vmem:[%s3 + $0x8] sm:$0xf]
    %v67 = vld [vmem:[%s3 + $0xc] sm:$0xf]
    %v68 = vld [vmem:[%s4] sm:$0x1]
    %v70 = vperm.slane %v68, 0
    %v76 = vunpack.c.l.b16 %v64
    %v77 = vunpack.c.l.b16 %v65
    %v78 = vunpack.c.l.b16 %v66
    %v79 = vunpack.c.l.b16 %v67
    %v80 = vpack.c.b16 %v77, %v76
    %v81 = vpack.c.b16 %v79, %v78
    %vm84 = vcmask 261120
    %v86 = vsel %vm84, %v63, 0
    %88 = vmatpush.bf16.msra.mxu0 0
    %89 = vmatpush.bf16.msra.mxu0 0
    %90 = vmatpush.bf16.msra.mxu0 0
    %91 = vmatpush.bf16.msra.mxu0 0
    %92 = vmatpush.bf16.msra.mxu0 0
    %93 = vmatpush.bf16.msra.mxu0 0
    %94 = vmatpush.bf16.msra.mxu0 %v81
    %95 = vmatpush.bf16.msra.mxu0 %v80
    %96 = vmatmul.bf16.gmra.mxu0 %v86
    %v97 = vpop.f32.mrf.mxu0
    %v98 = vadd.f32 %v70, %v97
    %v99 = vpop.f32.mrf.mxu0
    %100 = vdwg.mxu0
    %101 = vst [vmem:[#allocation2] sm:$0x3] %v98
    // Predicated region
    $region22: #{vit_forward.7} parent=1 // pred_check
      _
    $region23: #{vit_forward.7} parent=1 // pred_check_branch
      %103 = sbr.rel (0) target = $region25
    $region24: #{vit_forward.7} parent=1 // pred_region
      %105 = vsyncadd [#allocation3], 0
      %s107 = sshll.u32 [#allocation2], 4
      %s108 = int_to_ptr.vmem [resolvable:$true] %s107
      %s109 = sshll.u32 %s5, 4
      %s110 = int_to_ptr.hbm [resolvable:$true] %s109
      %112 = dma.vmem_to_hbm [thread:$0]  %s108, 32, %s110, [#allocation3]
    $region25: #{vit_forward.7} parent=1 // pred_fallthru
      _
    // Predicated region
    $region26: #{vit_forward.7} parent=1 // pred_check
      _
    $region27: #{vit_forward.7} parent=1 // pred_check_branch
      %114 = sbr.rel (0) target = $region29
    $region28: #{vit_forward.7} parent=1 // pred_region
      %116 = dma.done [#allocation3], 32
    $region29: #{vit_forward.7} parent=1 // pred_fallthru
      _
    %117 = vsyncpa [#allocation3], 1

// kernel: vit_forward.5
$region0: #{vit_forward.5}
  #allocation0 [shape = 'u32[]', space=smem, size = 0x4, offset = 0x4, fixed_abs, tag = 'smem constant byte address 0x4 - core index']
  #allocation1 [shape = 'u32[72,128]{1,0:T(1,128)}', space=vmem, size = 0x9000, scoped, tag = 'internal scratch']
  %s0 = inlined_call_operand.vmem [shape: f32[2,17,32], index: 0, kind: input, shape index: {}, may-alias: {0,13}]
  %s1 = inlined_call_operand.vmem [shape: f32[1,32], index: 1, kind: input, shape index: {}]
  %s2 = inlined_call_operand.vmem [shape: f32[1,32], index: 2, kind: input, shape index: {}]
  %s3 = inlined_call_operand.vmem [shape: bf16[32,96], index: 3, kind: input, shape index: {}]
  %s4 = inlined_call_operand.vmem [shape: f32[1,96], index: 4, kind: input, shape index: {}]
  %s5 = inlined_call_operand.vmem [shape: bf16[32,32], index: 5, kind: input, shape index: {}]
  %s6 = inlined_call_operand.vmem [shape: f32[1,32], index: 6, kind: input, shape index: {}]
  %s7 = inlined_call_operand.vmem [shape: f32[1,32], index: 7, kind: input, shape index: {}]
  %s8 = inlined_call_operand.vmem [shape: f32[1,32], index: 8, kind: input, shape index: {}]
  %s9 = inlined_call_operand.vmem [shape: bf16[32,128], index: 9, kind: input, shape index: {}]
  %s10 = inlined_call_operand.vmem [shape: f32[1,128], index: 10, kind: input, shape index: {}]
  %s11 = inlined_call_operand.vmem [shape: bf16[128,32], index: 11, kind: input, shape index: {}]
  %s12 = inlined_call_operand.vmem [shape: f32[1,32], index: 12, kind: input, shape index: {}]
  %s13 = inlined_call_operand.vmem [shape: f32[2,17,32], index: 13, kind: output, shape index: {}, may-alias: {0,13}]
  %s14 = sld [smem:[#allocation0]]
  $region85: #{vit_forward.5} parent=0
    _
  %s16 = ssub.s32 1, %s14
  %s17 = scalar_select 0, %s16, %s14
  loop: start=0, step=1, limit=4
  $region2: #{vit_forward.5} parent=0 // loop_pre_header
    _
  $region3: #{vit_forward.5} parent=0 // loop_header
    %s19 = sphi 0, %s23
    %p20 = scmp.ge.s32.totalorder %s19, 4
    %s29 = sphi 0, %s31
    %s32 = sphi 0, %s29
    %s33 = sphi 0, %s32
    %s49 = sphi 0, %s33
    %s53 = sphi 0, %s53
    %s55 = sphi 0, %s53
    %s56 = sphi 0, %s55
    %s70 = sphi 0, %s56
    %s74 = sphi 0, %s74
    %s76 = sphi 0, %s74
    %s77 = sphi 0, %s76
    %s91 = sphi 0, %s77
    %s95 = sphi 0, %s95
    %s97 = sphi 0, %s95
    %s98 = sphi 0, %s97
    %s112 = sphi 0, %s98
    %s116 = sphi 0, %s116
    %s118 = sphi 0, %s116
    %s119 = sphi 0, %s118
    %s133 = sphi 0, %s119
    %s137 = sphi 0, %s137
    %s139 = sphi 0, %s137
    %s140 = sphi 0, %s139
    %s154 = sphi 0, %s140
    %s158 = sphi 0, %s158
    %s160 = sphi 0, %s158
    %s161 = sphi 0, %s160
    %s175 = sphi 0, %s161
    %s179 = sphi 0, %s179
    %s181 = sphi 0, %s179
    %s182 = sphi 0, %s181
    %s196 = sphi 0, %s182
    %s200 = sphi 0, %s200
    %s202 = sphi 0, %s200
    %s203 = sphi 0, %s202
    %s217 = sphi 0, %s203
    %s221 = sphi 0, %s221
    %s223 = sphi 0, %s221
    %s224 = sphi 0, %s223
    %s238 = sphi 0, %s224
    %s242 = sphi 0, %s242
    %s244 = sphi 0, %s242
    %s245 = sphi 0, %s244
    %s259 = sphi 0, %s245
    %s263 = sphi 0, %s263
    %s265 = sphi 0, %s263
    %s266 = sphi 0, %s265
    %s280 = sphi 0, %s266
    %s284 = sphi 0, %s284
    %s286 = sphi 0, %s284
    %s287 = sphi 0, %s286
    %s301 = sphi 0, %s287
    %s307 = sphi 0, %s309
    %s310 = sphi 0, %s307
    %s311 = sphi 0, %s310
    %s327 = sphi 0, %s311
  $region4: #{vit_forward.5} parent=0 // loop_header_branch
    %22 = sbr.rel (%p20) target = $region8
  $region5: #{vit_forward.5} parent=0 // loop_body
    %s24 = ssub.s32 %s19, 1
    %s25 = ssub.s32 %s19, 2
    %s26 = sadd.s32 %s19, 1
    %s27 = ssub.s32 %s19, %s26
    %p28 = scmp.eq.s32.totalorder %s27, 0
    %s30 = sadd.s32 %s29, 1
    %s31 = scalar_select %p28, %s29, %s30
    %p34 = pneg %p28
    %p35 = scmp.eq.s32.totalorder %s19, 1
    %p36 = por %p34, %p35
    %p37 = scmp.ne.s32.totalorder %s29, %s32
    %p38 = scmp.eq.s32.totalorder %s19, 0
    %p39 = por %p37, %p38
    %p40 = scmp.ne.s32.totalorder %s29, %s32
    %p41 = scmp.eq.s32.totalorder %s24, 1
    %p42 = por %p40, %p41
    %p43 = scmp.ne.s32.totalorder %s32, %s33
    %p44 = scmp.eq.s32.totalorder %s24, 0
    %p45 = por %p43, %p44
    %p46 = scmp.ne.s32.totalorder %s32, %s33
    %p47 = scmp.eq.s32.totalorder %s25, 1
    %p48 = por %p46, %p47
    %p50 = scmp.ne.s32.totalorder %s33, %s49
    %p51 = scmp.eq.s32.totalorder %s25, 0
    %p52 = por %p50, %p51
    %s54 = sadd.s32 %s53, 1
    %p57 = scmp.eq.s32.totalorder %s19, 1
    %p58 = scmp.ne.s32.totalorder %s53, %s55
    %p59 = scmp.eq.s32.totalorder %s19, 0
    %p60 = por %p58, %p59
    %p61 = scmp.ne.s32.totalorder %s53, %s55
    %p62 = scmp.eq.s32.totalorder %s24, 1
    %p63 = por %p61, %p62
    %p64 = scmp.ne.s32.totalorder %s55, %s56
    %p65 = scmp.eq.s32.totalorder %s24, 0
    %p66 = por %p64, %p65
    %p67 = scmp.ne.s32.totalorder %s55, %s56
    %p68 = scmp.eq.s32.totalorder %s25, 1
    %p69 = por %p67, %p68
    %p71 = scmp.ne.s32.totalorder %s56, %s70
    %p72 = scmp.eq.s32.totalorder %s25, 0
    %p73 = por %p71, %p72
    %s75 = sadd.s32 %s74, 1
    %p78 = scmp.eq.s32.totalorder %s19, 1
    %p79 = scmp.ne.s32.totalorder %s74, %s76
    %p80 = scmp.eq.s32.totalorder %s19, 0
    %p81 = por %p79, %p80
    %p82 = scmp.ne.s32.totalorder %s74, %s76
    %p83 = scmp.eq.s32.totalorder %s24, 1
    %p84 = por %p82, %p83
    %p85 = scmp.ne.s32.totalorder %s76, %s77
    %p86 = scmp.eq.s32.totalorder %s24, 0
    %p87 = por %p85, %p86
    %p88 = scmp.ne.s32.totalorder %s76, %s77
    %p89 = scmp.eq.s32.totalorder %s25, 1
    %p90 = por %p88, %p89
    %p92 = scmp.ne.s32.totalorder %s77, %s91
    %p93 = scmp.eq.s32.totalorder %s25, 0
    %p94 = por %p92, %p93
    %s96 = sadd.s32 %s95, 1
    %p99 = scmp.eq.s32.totalorder %s19, 1
    %p100 = scmp.ne.s32.totalorder %s95, %s97
    %p101 = scmp.eq.s32.totalorder %s19, 0
    %p102 = por %p100, %p101
    %p103 = scmp.ne.s32.totalorder %s95, %s97
    %p104 = scmp.eq.s32.totalorder %s24, 1
    %p105 = por %p103, %p104
    %p106 = scmp.ne.s32.totalorder %s97, %s98
    %p107 = scmp.eq.s32.totalorder %s24, 0
    %p108 = por %p106, %p107
    %p109 = scmp.ne.s32.totalorder %s97, %s98
    %p110 = scmp.eq.s32.totalorder %s25, 1
    %p111 = por %p109, %p110
    %p113 = scmp.ne.s32.totalorder %s98, %s112
    %p114 = scmp.eq.s32.totalorder %s25, 0
    %p115 = por %p113, %p114
    %s117 = sadd.s32 %s116, 1
    %p120 = scmp.eq.s32.totalorder %s19, 1
    %p121 = scmp.ne.s32.totalorder %s116, %s118
    %p122 = scmp.eq.s32.totalorder %s19, 0
    %p123 = por %p121, %p122
    %p124 = scmp.ne.s32.totalorder %s116, %s118
    %p125 = scmp.eq.s32.totalorder %s24, 1
    %p126 = por %p124, %p125
    %p127 = scmp.ne.s32.totalorder %s118, %s119
    %p128 = scmp.eq.s32.totalorder %s24, 0
    %p129 = por %p127, %p128
    %p130 = scmp.ne.s32.totalorder %s118, %s119
    %p131 = scmp.eq.s32.totalorder %s25, 1
    %p132 = por %p130, %p131
    %p134 = scmp.ne.s32.totalorder %s119, %s133
    %p135 = scmp.eq.s32.totalorder %s25, 0
    %p136 = por %p134, %p135
    %s138 = sadd.s32 %s137, 1
    %p141 = scmp.eq.s32.totalorder %s19, 1
    %p142 = scmp.ne.s32.totalorder %s137, %s139
    %p143 = scmp.eq.s32.totalorder %s19, 0
    %p144 = por %p142, %p143
    %p145 = scmp.ne.s32.totalorder %s137, %s139
    %p146 = scmp.eq.s32.totalorder %s24, 1
    %p147 = por %p145, %p146
    %p148 = scmp.ne.s32.totalorder %s139, %s140
    %p149 = scmp.eq.s32.totalorder %s24, 0
    %p150 = por %p148, %p149
    %p151 = scmp.ne.s32.totalorder %s139, %s140
    %p152 = scmp.eq.s32.totalorder %s25, 1
    %p153 = por %p151, %p152
    %p155 = scmp.ne.s32.totalorder %s140, %s154
    %p156 = scmp.eq.s32.totalorder %s25, 0
    %p157 = por %p155, %p156
    %s159 = sadd.s32 %s158, 1
    %p162 = scmp.eq.s32.totalorder %s19, 1
    %p163 = scmp.ne.s32.totalorder %s158, %s160
    %p164 = scmp.eq.s32.totalorder %s19, 0
    %p165 = por %p163, %p164
    %p166 = scmp.ne.s32.totalorder %s158, %s160
    %p167 = scmp.eq.s32.totalorder %s24, 1
    %p168 = por %p166, %p167
    %p169 = scmp.ne.s32.totalorder %s160, %s161
    %p170 = scmp.eq.s32.totalorder %s24, 0
    %p171 = por %p169, %p170
    %p172 = scmp.ne.s32.totalorder %s160, %s161
    %p173 = scmp.eq.s32.totalorder %s25, 1
    %p174 = por %p172, %p173
    %p176 = scmp.ne.s32.totalorder %s161, %s175
    %p177 = scmp.eq.s32.totalorder %s25, 0
    %p178 = por %p176, %p177
    %s180 = sadd.s32 %s179, 1
    %p183 = scmp.eq.s32.totalorder %s19, 1
    %p184 = scmp.ne.s32.totalorder %s179, %s181
    %p185 = scmp.eq.s32.totalorder %s19, 0
    %p186 = por %p184, %p185
    %p187 = scmp.ne.s32.totalorder %s179, %s181
    %p188 = scmp.eq.s32.totalorder %s24, 1
    %p189 = por %p187, %p188
    %p190 = scmp.ne.s32.totalorder %s181, %s182
    %p191 = scmp.eq.s32.totalorder %s24, 0
    %p192 = por %p190, %p191
    %p193 = scmp.ne.s32.totalorder %s181, %s182
    %p194 = scmp.eq.s32.totalorder %s25, 1
    %p195 = por %p193, %p194
    %p197 = scmp.ne.s32.totalorder %s182, %s196
    %p198 = scmp.eq.s32.totalorder %s25, 0
    %p199 = por %p197, %p198
    %s201 = sadd.s32 %s200, 1
    %p204 = scmp.eq.s32.totalorder %s19, 1
    %p205 = scmp.ne.s32.totalorder %s200, %s202
    %p206 = scmp.eq.s32.totalorder %s19, 0
    %p207 = por %p205, %p206
    %p208 = scmp.ne.s32.totalorder %s200, %s202
    %p209 = scmp.eq.s32.totalorder %s24, 1
    %p210 = por %p208, %p209
    %p211 = scmp.ne.s32.totalorder %s202, %s203
    %p212 = scmp.eq.s32.totalorder %s24, 0
    %p213 = por %p211, %p212
    %p214 = scmp.ne.s32.totalorder %s202, %s203
    %p215 = scmp.eq.s32.totalorder %s25, 1
    %p216 = por %p214, %p215
    %p218 = scmp.ne.s32.totalorder %s203, %s217
    %p219 = scmp.eq.s32.totalorder %s25, 0
    %p220 = por %p218, %p219
    %s222 = sadd.s32 %s221, 1
    %p225 = scmp.eq.s32.totalorder %s19, 1
    %p226 = scmp.ne.s32.totalorder %s221, %s223
    %p227 = scmp.eq.s32.totalorder %s19, 0
    %p228 = por %p226, %p227
    %p229 = scmp.ne.s32.totalorder %s221, %s223
    %p230 = scmp.eq.s32.totalorder %s24, 1
    %p231 = por %p229, %p230
    %p232 = scmp.ne.s32.totalorder %s223, %s224
    %p233 = scmp.eq.s32.totalorder %s24, 0
    %p234 = por %p232, %p233
    %p235 = scmp.ne.s32.totalorder %s223, %s224
    %p236 = scmp.eq.s32.totalorder %s25, 1
    %p237 = por %p235, %p236
    %p239 = scmp.ne.s32.totalorder %s224, %s238
    %p240 = scmp.eq.s32.totalorder %s25, 0
    %p241 = por %p239, %p240
    %s243 = sadd.s32 %s242, 1
    %p246 = scmp.eq.s32.totalorder %s19, 1
    %p247 = scmp.ne.s32.totalorder %s242, %s244
    %p248 = scmp.eq.s32.totalorder %s19, 0
    %p249 = por %p247, %p248
    %p250 = scmp.ne.s32.totalorder %s242, %s244
    %p251 = scmp.eq.s32.totalorder %s24, 1
    %p252 = por %p250, %p251
    %p253 = scmp.ne.s32.totalorder %s244, %s245
    %p254 = scmp.eq.s32.totalorder %s24, 0
    %p255 = por %p253, %p254
    %p256 = scmp.ne.s32.totalorder %s244, %s245
    %p257 = scmp.eq.s32.totalorder %s25, 1
    %p258 = por %p256, %p257
    %p260 = scmp.ne.s32.totalorder %s245, %s259
    %p261 = scmp.eq.s32.totalorder %s25, 0
    %p262 = por %p260, %p261
    %s264 = sadd.s32 %s263, 1
    %p267 = scmp.eq.s32.totalorder %s19, 1
    %p268 = scmp.ne.s32.totalorder %s263, %s265
    %p269 = scmp.eq.s32.totalorder %s19, 0
    %p270 = por %p268, %p269
    %p271 = scmp.ne.s32.totalorder %s263, %s265
    %p272 = scmp.eq.s32.totalorder %s24, 1
    %p273 = por %p271, %p272
    %p274 = scmp.ne.s32.totalorder %s265, %s266
    %p275 = scmp.eq.s32.totalorder %s24, 0
    %p276 = por %p274, %p275
    %p277 = scmp.ne.s32.totalorder %s265, %s266
    %p278 = scmp.eq.s32.totalorder %s25, 1
    %p279 = por %p277, %p278
    %p281 = scmp.ne.s32.totalorder %s266, %s280
    %p282 = scmp.eq.s32.totalorder %s25, 0
    %p283 = por %p281, %p282
    %s285 = sadd.s32 %s284, 1
    %p288 = scmp.eq.s32.totalorder %s19, 1
    %p289 = scmp.ne.s32.totalorder %s284, %s286
    %p290 = scmp.eq.s32.totalorder %s19, 0
    %p291 = por %p289, %p290
    %p292 = scmp.ne.s32.totalorder %s284, %s286
    %p293 = scmp.eq.s32.totalorder %s24, 1
    %p294 = por %p292, %p293
    %p295 = scmp.ne.s32.totalorder %s286, %s287
    %p296 = scmp.eq.s32.totalorder %s24, 0
    %p297 = por %p295, %p296
    %p298 = scmp.ne.s32.totalorder %s286, %s287
    %p299 = scmp.eq.s32.totalorder %s25, 1
    %p300 = por %p298, %p299
    %p302 = scmp.ne.s32.totalorder %s287, %s301
    %p303 = scmp.eq.s32.totalorder %s25, 0
    %p304 = por %p302, %p303
    %s305 = ssub.s32 %s19, %s26
    %p306 = scmp.eq.s32.totalorder %s305, 0
    %s308 = sadd.s32 %s307, 1
    %s309 = scalar_select %p306, %s307, %s308
    %p312 = pneg %p306
    %p313 = scmp.eq.s32.totalorder %s19, 1
    %p314 = por %p312, %p313
    %p315 = scmp.ne.s32.totalorder %s307, %s310
    %p316 = scmp.eq.s32.totalorder %s19, 0
    %p317 = por %p315, %p316
    %p318 = scmp.ne.s32.totalorder %s307, %s310
    %p319 = scmp.eq.s32.totalorder %s24, 1
    %p320 = por %p318, %p319
    %p321 = scmp.ne.s32.totalorder %s310, %s311
    %p322 = scmp.eq.s32.totalorder %s24, 0
    %p323 = por %p321, %p322
    %p324 = scmp.ne.s32.totalorder %s310, %s311
    %p325 = scmp.eq.s32.totalorder %s25, 1
    %p326 = por %p324, %p325
    %p328 = scmp.ne.s32.totalorder %s311, %s327
    %p329 = scmp.eq.s32.totalorder %s25, 0
    %p330 = por %p328, %p329
    %p331 = scmp.le.s32.totalorder 1, %s19
    %p332 = scmp.lt.s32.totalorder %s19, 3
    %p333 = pnand %p331, %p332
    %p334 = pneg %p333
    // Predicated region
    $region9: #{vit_forward.5} parent=5 // pred_check
      _
    $region10: #{vit_forward.5} parent=5 // pred_check_branch
      %336 = sbr.rel (%p333) target = $region12
    $region11: #{vit_forward.5} parent=5 // pred_region
      %s337 = ssub.s32 %s19, 1
      // Predicated region
      $region13: #{vit_forward.5} parent=11 // pred_check
        %p338 = pneg %p66
      $region14: #{vit_forward.5} parent=11 // pred_check_branch
        %340 = sbr.rel (%p338) target = $region16
      $region15: #{vit_forward.5} parent=11 // pred_region
        _
      $region16: #{vit_forward.5} parent=11 // pred_fallthru
        _
      // Predicated region
      $region17: #{vit_forward.5} parent=11 // pred_check
        %p341 = pneg %p87
      $region18: #{vit_forward.5} parent=11 // pred_check_branch
        %343 = sbr.rel (%p341) target = $region20
      $region19: #{vit_forward.5} parent=11 // pred_region
        _
      $region20: #{vit_forward.5} parent=11 // pred_fallthru
        _
      // Predicated region
      $region21: #{vit_forward.5} parent=11 // pred_check
        %p344 = pneg %p108
      $region22: #{vit_forward.5} parent=11 // pred_check_branch
        %346 = sbr.rel (%p344) target = $region24
      $region23: #{vit_forward.5} parent=11 // pred_region
        _
      $region24: #{vit_forward.5} parent=11 // pred_fallthru
        _
      // Predicated region
      $region25: #{vit_forward.5} parent=11 // pred_check
        %p347 = pneg %p129
      $region26: #{vit_forward.5} parent=11 // pred_check_branch
        %349 = sbr.rel (%p347) target = $region28
      $region27: #{vit_forward.5} parent=11 // pred_region
        _
      $region28: #{vit_forward.5} parent=11 // pred_fallthru
        _
      // Predicated region
      $region29: #{vit_forward.5} parent=11 // pred_check
        %p350 = pneg %p150
      $region30: #{vit_forward.5} parent=11 // pred_check_branch
        %352 = sbr.rel (%p350) target = $region32
      $region31: #{vit_forward.5} parent=11 // pred_region
        _
      $region32: #{vit_forward.5} parent=11 // pred_fallthru
        _
      // Predicated region
      $region33: #{vit_forward.5} parent=11 // pred_check
        %p353 = pneg %p171
      $region34: #{vit_forward.5} parent=11 // pred_check_branch
        %355 = sbr.rel (%p353) target = $region36
      $region35: #{vit_forward.5} parent=11 // pred_region
        _
      $region36: #{vit_forward.5} parent=11 // pred_fallthru
        _
      // Predicated region
      $region37: #{vit_forward.5} parent=11 // pred_check
        %p356 = pneg %p192
      $region38: #{vit_forward.5} parent=11 // pred_check_branch
        %358 = sbr.rel (%p356) target = $region40
      $region39: #{vit_forward.5} parent=11 // pred_region
        _
      $region40: #{vit_forward.5} parent=11 // pred_fallthru
        _
      // Predicated region
      $region41: #{vit_forward.5} parent=11 // pred_check
        %p359 = pneg %p213
      $region42: #{vit_forward.5} parent=11 // pred_check_branch
        %361 = sbr.rel (%p359) target = $region44
      $region43: #{vit_forward.5} parent=11 // pred_region
        _
      $region44: #{vit_forward.5} parent=11 // pred_fallthru
        _
      // Predicated region
      $region45: #{vit_forward.5} parent=11 // pred_check
        %p362 = pneg %p234
      $region46: #{vit_forward.5} parent=11 // pred_check_branch
        %364 = sbr.rel (%p362) target = $region48
      $region47: #{vit_forward.5} parent=11 // pred_region
        _
      $region48: #{vit_forward.5} parent=11 // pred_fallthru
        _
      // Predicated region
      $region49: #{vit_forward.5} parent=11 // pred_check
        %p365 = pneg %p255
      $region50: #{vit_forward.5} parent=11 // pred_check_branch
        %367 = sbr.rel (%p365) target = $region52
      $region51: #{vit_forward.5} parent=11 // pred_region
        _
      $region52: #{vit_forward.5} parent=11 // pred_fallthru
        _
      // Predicated region
      $region53: #{vit_forward.5} parent=11 // pred_check
        %p368 = pneg %p276
      $region54: #{vit_forward.5} parent=11 // pred_check_branch
        %370 = sbr.rel (%p368) target = $region56
      $region55: #{vit_forward.5} parent=11 // pred_region
        _
      $region56: #{vit_forward.5} parent=11 // pred_fallthru
        _
      // Predicated region
      $region57: #{vit_forward.5} parent=11 // pred_check
        %p371 = pneg %p297
      $region58: #{vit_forward.5} parent=11 // pred_check_branch
        %373 = sbr.rel (%p371) target = $region60
      $region59: #{vit_forward.5} parent=11 // pred_region
        _
      $region60: #{vit_forward.5} parent=11 // pred_fallthru
        _
    $region12: #{vit_forward.5} parent=5 // pred_fallthru
      _
    %p374 = scmp.lt.s32.totalorder %s19, 2
    // Predicated region
    $region61: #{vit_forward.5} parent=5 // pred_check
      %p375 = pneg %p374
    $region62: #{vit_forward.5} parent=5 // pred_check_branch
      %377 = sbr.rel (%p375) target = $region64
    $region63: #{vit_forward.5} parent=5 // pred_region
      // Predicated region
      $region65: #{vit_forward.5} parent=63 // pred_check
        %p378 = pneg %p39
      $region66: #{vit_forward.5} parent=63 // pred_check_branch
        %380 = sbr.rel (%p378) target = $region68
      $region67: #{vit_forward.5} parent=63 // pred_region
        %p381 = scmp.lt.s32.totalorder %s19, 1
        %s382 = scalar_select %p381, %s19, 1
        %s383 = smul.addr %s382, 3
        %s384 = smul.addr %s383, 8
        %s385 = scalar_lea.vmem %s0, %s384
      $region68: #{vit_forward.5} parent=63 // pred_fallthru
        _
    $region64: #{vit_forward.5} parent=5 // pred_fallthru
      _
    %p386 = scmp.le.s32.totalorder 1, %s19
    %p387 = scmp.lt.s32.totalorder %s19, 3
    %p388 = pnand %p386, %p387
    %p389 = pneg %p388
    // Predicated region
    $region69: #{vit_forward.5} parent=5 // pred_check
      _
    $region70: #{vit_forward.5} parent=5 // pred_check_branch
      %391 = sbr.rel (%p388) target = $region72
    $region71: #{vit_forward.5} parent=5 // pred_region
      %s392 = ssub.s32 %s19, 1
      %p393 = scmp.lt.s32.totalorder %s24, 1
      %s394 = scalar_select %p393, %s24, 1
      %s395 = smul.addr %s394, 3
      %s396 = smul.addr %s395, 8
      %s397 = scalar_lea.vmem %s0, %s396
      %p398 = pneg %p45
      %p399 = pneg %p42
      %p400 = pneg %p66
      %p401 = pneg %p63
      %p402 = pneg %p87
      %p403 = pneg %p84
      %p404 = pneg %p108
      %p405 = pneg %p105
      %p406 = pneg %p129
      %p407 = pneg %p126
      %p408 = pneg %p150
      %p409 = pneg %p147
      %p410 = pneg %p171
      %p411 = pneg %p168
      %p412 = pneg %p192
      %p413 = pneg %p189
      %p414 = pneg %p213
      %p415 = pneg %p210
      %p416 = pneg %p234
      %p417 = pneg %p231
      %p418 = pneg %p255
      %p419 = pneg %p252
      %p420 = pneg %p276
      %p421 = pneg %p273
      %p422 = pneg %p297
      %p423 = pneg %p294
      %p424 = pneg %p323
      %p425 = pneg %p320
      %p426 = scmp.lt.s32.totalorder %s24, 1
      %s427 = scalar_select %p426, %s24, 1
      %s428 = smul.addr %s427, 3
      %s429 = smul.addr %s428, 8
      %s430 = scalar_lea.vmem %s13, %s429
      %p431 = scmp.lt.s32.totalorder %s24, 1
      %s432 = scalar_select %p431, %s24, 1
      %s433 = smul.addr %s432, 3
      %s434 = smul.addr %s433, 8
      %s435 = scalar_lea.vmem %s0, %s434
      %p436 = scmp.lt.s32.totalorder %s24, 1
      %s437 = scalar_select %p436, %s24, 1
      %s438 = smul.addr %s437, 3
      %s439 = smul.addr %s438, 8
      %s440 = scalar_lea.vmem %s13, %s439
      %v442 = vld [vmem:[%s435] sm:$0xff]
      %v443 = vld [vmem:[%s435 + $0x8] sm:$0xff]
      %v444 = vld [vmem:[%s435 + $0x10] sm:$0x1]
      %v445 = vld [vmem:[%s1] sm:$0x1]
      %v446 = vld [vmem:[%s2] sm:$0x1]
      %vm447 = vcmask 261120
      %v448 = vsel %vm447, %v442, 0.0
      %449 = vadd.xlane.f32.xlu0 %v448
      %v450 = vpop.xlane.xlu0 %449
      %v451 = vsel %vm447, %v443, 0.0
      %452 = vadd.xlane.f32.xlu0 %v451
      %v453 = vpop.xlane.xlu0 %452
      %vm454 = vcmask 253952
      %v455 = vsel %vm454, %v444, 0.0
      %456 = vadd.xlane.f32.xlu0 %v455
      %v457 = vpop.xlane.xlu0 %456
      %v458 = vrcp.pop 32.0
      %v459 = vmul.f32 32.0, %v458
      %v460 = vsub.f32 1.0, %v459
      %v461 = vmul.f32 %v458, %v460
      %v462 = vadd.f32 %v458, %v461
      %vm463 = vweird.f32 %v458
      %v464 = vsel %vm463, %v458, %v462
      %v465 = vmul.f32 %v450, %v464
      %v466 = vmul.f32 %v453, %v464
      %v467 = vmul.f32 %v457, %v464
      %v468 = vsub.f32 %v442, %v465
      %v469 = vsub.f32 %v443, %v466
      %v470 = vsub.f32 %v444, %v467
      %v471 = vmul.f32 %v468, %v468
      %v472 = vmul.f32 %v469, %v469
      %v473 = vmul.f32 %v470, %v470
      %v474 = vsel %vm447, %v471, 0.0
      %475 = vadd.xlane.f32.xlu0 %v474
      %v476 = vpop.xlane.xlu0 %475
      %v477 = vsel %vm447, %v472, 0.0
      %478 = vadd.xlane.f32.xlu0 %v477
      %v479 = vpop.xlane.xlu0 %478
      %v480 = vsel %vm454, %v473, 0.0
      %481 = vadd.xlane.f32.xlu0 %v480
      %v482 = vpop.xlane.xlu0 %481
      %v483 = vmul.f32 %v476, %v464
      %v484 = vmul.f32 %v479, %v464
      %v485 = vmul.f32 %v482, %v464
      %v486 = vadd.f32 %v483, 1e-06
      %v487 = vadd.f32 %v484, 1e-06
      %v488 = vadd.f32 %v485, 1e-06
      %v489 = vrsqrt.pop %v486
      %v490 = vmul.f32 %v489, %v486
      %v491 = vmul.f32 %v490, %v489
      %v492 = vmul.f32 0.5, %v491
      %v493 = vsub.f32 1.5, %v492
      %v494 = vmul.f32 %v489, %v493
      %vm495 = vweird.f32 %v486
      %vm496 = vweird.f32 %v489
      %vm497 = vmor %vm495, %vm496
      %v498 = vsel %vm497, %v489, %v494
      %v499 = vrsqrt.pop %v487
      %v500 = vmul.f32 %v499, %v487
      %v501 = vmul.f32 %v500, %v499
      %v502 = vmul.f32 0.5, %v501
      %v503 = vsub.f32 1.5, %v502
      %v504 = vmul.f32 %v499, %v503
      %vm505 = vweird.f32 %v487
      %vm506 = vweird.f32 %v499
      %vm507 = vmor %vm505, %vm506
      %v508 = vsel %vm507, %v499, %v504
      %v509 = vrsqrt.pop %v488
      %v510 = vmul.f32 %v509, %v488
      %v511 = vmul.f32 %v510, %v509
      %v512 = vmul.f32 0.5, %v511
      %v513 = vsub.f32 1.5, %v512
      %v514 = vmul.f32 %v509, %v513
      %vm515 = vweird.f32 %v488
      %vm516 = vweird.f32 %v509
      %vm517 = vmor %vm515, %vm516
      %v518 = vsel %vm517, %v509, %v514
      %v519 = vmul.f32 %v468, %v498
      %v520 = vmul.f32 %v469, %v508
      %v521 = vmul.f32 %v470, %v518
      %v523 = vperm.slane %v445, 0
      %v525 = vmul.f32 %v519, %v523
      %v526 = vmul.f32 %v520, %v523
      %v527 = vmul.f32 %v521, %v523
      %v529 = vperm.slane %v446, 0
      %v531 = vadd.f32 %v525, %v529
      %v532 = vadd.f32 %v526, %v529
      %v533 = vadd.f32 %v527, %v529
      %v534 = vpack.c.bf16 %v532, %v531
      %v535 = vpack.c.bf16 %v533, %v533
      %v536 = vld [vmem:[%s3] sm:$0xf]
      %v537 = vld [vmem:[%s3 + $0x4] sm:$0xf]
      %v538 = vld [vmem:[%s3 + $0x8] sm:$0xf]
      %v539 = vld [vmem:[%s3 + $0xc] sm:$0xf]
      %v540 = vld [vmem:[%s4] sm:$0x1]
      %v542 = vperm.slane %v540, 0
      %v548 = vunpack.c.l.b16 %v536
      %v549 = vunpack.c.l.b16 %v537
      %v550 = vunpack.c.l.b16 %v538
      %v551 = vunpack.c.l.b16 %v539
      %v552 = vpack.c.b16 %v549, %v548
      %v553 = vpack.c.b16 %v551, %v550
      %v557 = vsel %vm447, %v534, 0
      %v560 = vsel %vm447, %v535, 0
      %562 = vmatpush.bf16.msra.mxu0 0
      %563 = vmatpush.bf16.msra.mxu0 0
      %564 = vmatpush.bf16.msra.mxu0 0
      %565 = vmatpush.bf16.msra.mxu0 0
      %566 = vmatpush.bf16.msra.mxu0 0
      %567 = vmatpush.bf16.msra.mxu0 0
      %568 = vmatpush.bf16.msra.mxu0 %v553
      %569 = vmatpush.bf16.msra.mxu0 %v552
      %570 = vmatmul.bf16.gmra.mxu0 %v557
      %v571 = vpop.f32.mrf.mxu0
      %v572 = vadd.f32 %v542, %v571
      %v573 = vpop.f32.mrf.mxu0
      %v574 = vadd.f32 %v542, %v573
      %575 = vmatmul.bf16.gmra.mxu0 %v560
      %v576 = vpop.f32.mrf.mxu0
      %v577 = vadd.f32 %v542, %v576
      %v578 = vpop.f32.mrf.mxu0
      %579 = vdwg.mxu0
      %v580 = vpack.c.bf16 %v572, %v572
      %v581 = vpack.c.bf16 %v574, %v574
      %v582 = vpack.c.bf16 %v577, %v577
      %586 = vrot.lane.b32.xlu0 %v580, 120
      %v587 = vpop.permute.xlu0 %586
      %588 = vrot.lane.b32.xlu0 %v581, 120
      %v589 = vpop.permute.xlu0 %588
      %590 = vrot.lane.b32.xlu0 %v582, 120
      %v591 = vpop.permute.xlu0 %590
      %592 = vrot.lane.b32.xlu0 %v580, 112
      %v593 = vpop.permute.xlu0 %592
      %594 = vrot.lane.b32.xlu0 %v581, 112
      %v595 = vpop.permute.xlu0 %594
      %596 = vrot.lane.b32.xlu0 %v582, 112
      %v597 = vpop.permute.xlu0 %596
      %598 = vrot.lane.b32.xlu0 %v580, 104
      %v599 = vpop.permute.xlu0 %598
      %600 = vrot.lane.b32.xlu0 %v581, 104
      %v601 = vpop.permute.xlu0 %600
      %602 = vrot.lane.b32.xlu0 %v582, 104
      %v603 = vpop.permute.xlu0 %602
      %v604 = vunpack.c.l.b16 %v580
      %v605 = vunpack.c.l.b16 %v581
      %v606 = vunpack.c.l.b16 %v582
      %v607 = vpack.c.b16 %v605, %v604
      %v608 = vpack.c.b16 %v606, %v606
      %609 = vrot.lane.b32.xlu0 %v607, 96
      %v610 = vpop.permute.xlu0 %609
      %611 = vrot.lane.b32.xlu0 %v608, 96
      %v612 = vpop.permute.xlu0 %611
      %vm613 = vcmask 64512
      %v615 = vsel %vm613, %v607, 0
      %v618 = vsel %vm613, %v608, 0
      %v621 = vsel %vm613, %v610, 0
      %v624 = vsel %vm613, %v612, 0
      %626 = vmatpush.bf16.xpose.msra.mxu0 0
      %627 = vmatpush.bf16.xpose.msra.mxu0 0
      %628 = vmatpush.bf16.xpose.msra.mxu0 0
      %629 = vmatpush.bf16.xpose.msra.mxu0 0
      %630 = vmatpush.bf16.xpose.msra.mxu0 0
      %631 = vmatpush.bf16.xpose.msra.mxu0 0
      %632 = vmatpush.bf16.xpose.msra.mxu0 %v624
      %633 = vmatpush.bf16.xpose.msra.mxu0 %v621
      %634 = vmatmul.bf16.gmra.mxu0 %v615
      %v635 = vpop.f32.mrf.mxu0
      %v636 = vadd.f32 0.0, %v635
      %v637 = vpop.f32.mrf.mxu0
      %v638 = vadd.f32 0.0, %v637
      %639 = vmatmul.bf16.gmra.mxu0 %v618
      %v640 = vpop.f32.mrf.mxu0
      %v641 = vadd.f32 0.0, %v640
      %v642 = vpop.f32.mrf.mxu0
      %643 = vdwg.mxu0
      %v644 = vunpack.c.l.b16 %v587
      %v645 = vunpack.c.l.b16 %v589
      %v646 = vunpack.c.l.b16 %v591
      %v647 = vpack.c.b16 %v645, %v644
      %v648 = vpack.c.b16 %v646, %v646
      %649 = vrot.lane.b32.xlu0 %v647, 96
      %v650 = vpop.permute.xlu0 %649
      %651 = vrot.lane.b32.xlu0 %v648, 96
      %v652 = vpop.permute.xlu0 %651
      %v654 = vsel %vm613, %v647, 0
      %v657 = vsel %vm613, %v648, 0
      %v660 = vsel %vm613, %v650, 0
      %v663 = vsel %vm613, %v652, 0
      %665 = vmatpush.bf16.xpose.msra.mxu0 0
      %666 = vmatpush.bf16.xpose.msra.mxu0 0
      %667 = vmatpush.bf16.xpose.msra.mxu0 0
      %668 = vmatpush.bf16.xpose.msra.mxu0 0
      %669 = vmatpush.bf16.xpose.msra.mxu0 0
      %670 = vmatpush.bf16.xpose.msra.mxu0 0
      %671 = vmatpush.bf16.xpose.msra.mxu0 %v663
      %672 = vmatpush.bf16.xpose.msra.mxu0 %v660
      %673 = vmatmul.bf16.gmra.mxu0 %v654
      %v674 = vpop.f32.mrf.mxu0
      %v675 = vadd.f32 0.0, %v674
      %v676 = vpop.f32.mrf.mxu0
      %v677 = vadd.f32 0.0, %v676
      %678 = vmatmul.bf16.gmra.mxu0 %v657
      %v679 = vpop.f32.mrf.mxu0
      %v680 = vadd.f32 0.0, %v679
      %v681 = vpop.f32.mrf.mxu0
      %682 = vdwg.mxu0
      %v683 = vunpack.c.l.b16 %v593
      %v684 = vunpack.c.l.b16 %v595
      %v685 = vunpack.c.l.b16 %v597
      %v686 = vpack.c.b16 %v684, %v683
      %v687 = vpack.c.b16 %v685, %v685
      %688 = vrot.lane.b32.xlu0 %v686, 96
      %v689 = vpop.permute.xlu0 %688
      %690 = vrot.lane.b32.xlu0 %v687, 96
      %v691 = vpop.permute.xlu0 %690
      %v693 = vsel %vm613, %v686, 0
      %v696 = vsel %vm613, %v687, 0
      %v699 = vsel %vm613, %v689, 0
      %v702 = vsel %vm613, %v691, 0
      %704 = vmatpush.bf16.xpose.msra.mxu0 0
      %705 = vmatpush.bf16.xpose.msra.mxu0 0
      %706 = vmatpush.bf16.xpose.msra.mxu0 0
      %707 = vmatpush.bf16.xpose.msra.mxu0 0
      %708 = vmatpush.bf16.xpose.msra.mxu0 0
      %709 = vmatpush.bf16.xpose.msra.mxu0 0
      %710 = vmatpush.bf16.xpose.msra.mxu0 %v702
      %711 = vmatpush.bf16.xpose.msra.mxu0 %v699
      %712 = vmatmul.bf16.gmra.mxu0 %v693
      %v713 = vpop.f32.mrf.mxu0
      %v714 = vadd.f32 0.0, %v713
      %v715 = vpop.f32.mrf.mxu0
      %v716 = vadd.f32 0.0, %v715
      %717 = vmatmul.bf16.gmra.mxu0 %v696
      %v718 = vpop.f32.mrf.mxu0
      %v719 = vadd.f32 0.0, %v718
      %v720 = vpop.f32.mrf.mxu0
      %721 = vdwg.mxu0
      %v722 = vunpack.c.l.b16 %v599
      %v723 = vunpack.c.l.b16 %v601
      %v724 = vunpack.c.l.b16 %v603
      %v725 = vpack.c.b16 %v723, %v722
      %v726 = vpack.c.b16 %v724, %v724
      %727 = vrot.lane.b32.xlu0 %v725, 96
      %v728 = vpop.permute.xlu0 %727
      %729 = vrot.lane.b32.xlu0 %v726, 96
      %v730 = vpop.permute.xlu0 %729
      %v732 = vsel %vm613, %v725, 0
      %v735 = vsel %vm613, %v726, 0
      %v738 = vsel %vm613, %v728, 0
      %v741 = vsel %vm613, %v730, 0
      %743 = vmatpush.bf16.xpose.msra.mxu0 0
      %744 = vmatpush.bf16.xpose.msra.mxu0 0
      %745 = vmatpush.bf16.xpose.msra.mxu0 0
      %746 = vmatpush.bf16.xpose.msra.mxu0 0
      %747 = vmatpush.bf16.xpose.msra.mxu0 0
      %748 = vmatpush.bf16.xpose.msra.mxu0 0
      %749 = vmatpush.bf16.xpose.msra.mxu0 %v741
      %750 = vmatpush.bf16.xpose.msra.mxu0 %v738
      %751 = vmatmul.bf16.gmra.mxu0 %v732
      %v752 = vpop.f32.mrf.mxu0
      %v753 = vadd.f32 0.0, %v752
      %v754 = vpop.f32.mrf.mxu0
      %v755 = vadd.f32 0.0, %v754
      %756 = vmatmul.bf16.gmra.mxu0 %v735
      %v757 = vpop.f32.mrf.mxu0
      %v758 = vadd.f32 0.0, %v757
      %v759 = vpop.f32.mrf.mxu0
      %760 = vdwg.mxu0
      %vm761 = vcmask 138240
      %v762 = vsel %vm761, %v636, -inf
      %763 = vmax.xlane.f32.xlu0 %v762
      %v764 = vpop.xlane.xlu0 %763
      %v765 = vsel %vm761, %v638, -inf
      %766 = vmax.xlane.f32.xlu0 %v765
      %v767 = vpop.xlane.xlu0 %766
      %vm768 = vcmask 131072
      %v769 = vsel %vm768, %v641, -inf
      %770 = vmax.xlane.f32.xlu0 %v769
      %v771 = vpop.xlane.xlu0 %770
      %v772 = vsel %vm761, %v675, -inf
      %773 = vmax.xlane.f32.xlu0 %v772
      %v774 = vpop.xlane.xlu0 %773
      %v775 = vsel %vm761, %v677, -inf
      %776 = vmax.xlane.f32.xlu0 %v775
      %v777 = vpop.xlane.xlu0 %776
      %v778 = vsel %vm768, %v680, -inf
      %779 = vmax.xlane.f32.xlu0 %v778
      %v780 = vpop.xlane.xlu0 %779
      %v781 = vsel %vm761, %v714, -inf
      %782 = vmax.xlane.f32.xlu0 %v781
      %v783 = vpop.xlane.xlu0 %782
      %v784 = vsel %vm761, %v716, -inf
      %785 = vmax.xlane.f32.xlu0 %v784
      %v786 = vpop.xlane.xlu0 %785
      %v787 = vsel %vm768, %v719, -inf
      %788 = vmax.xlane.f32.xlu0 %v787
      %v789 = vpop.xlane.xlu0 %788
      %v790 = vsel %vm761, %v753, -inf
      %791 = vmax.xlane.f32.xlu0 %v790
      %v792 = vpop.xlane.xlu0 %791
      %v793 = vsel %vm761, %v755, -inf
      %794 = vmax.xlane.f32.xlu0 %v793
      %v795 = vpop.xlane.xlu0 %794
      %v796 = vsel %vm768, %v758, -inf
      %797 = vmax.xlane.f32.xlu0 %v796
      %v798 = vpop.xlane.xlu0 %797
      %v799 = vsub.f32 %v636, %v764
      %v800 = vsub.f32 %v638, %v767
      %v801 = vsub.f32 %v641, %v771
      %v802 = vsub.f32 %v675, %v774
      %v803 = vsub.f32 %v677, %v777
      %v804 = vsub.f32 %v680, %v780
      %v805 = vsub.f32 %v714, %v783
      %v806 = vsub.f32 %v716, %v786
      %v807 = vsub.f32 %v719, %v789
      %v808 = vsub.f32 %v753, %v792
      %v809 = vsub.f32 %v755, %v795
      %v810 = vsub.f32 %v758, %v798
      %v811 = vmul.f32 %v799, 1.442695
      %v812 = vpow.pop %v811
      %v813 = vmul.f32 %v800, 1.442695
      %v814 = vpow.pop %v813
      %v815 = vmul.f32 %v801, 1.442695
      %v816 = vpow.pop %v815
      %v817 = vmul.f32 %v802, 1.442695
      %v818 = vpow.pop %v817
      %v819 = vmul.f32 %v803, 1.442695
      %v820 = vpow.pop %v819
      %v821 = vmul.f32 %v804, 1.442695
      %v822 = vpow.pop %v821
      %v823 = vmul.f32 %v805, 1.442695
      %v824 = vpow.pop %v823
      %v825 = vmul.f32 %v806, 1.442695
      %v826 = vpow.pop %v825
      %v827 = vmul.f32 %v807, 1.442695
      %v828 = vpow.pop %v827
      %v829 = vmul.f32 %v808, 1.442695
      %v830 = vpow.pop %v829
      %v831 = vmul.f32 %v809, 1.442695
      %v832 = vpow.pop %v831
      %v833 = vmul.f32 %v810, 1.442695
      %v834 = vpow.pop %v833
      %v835 = vsel %vm761, %v812, 0.0
      %836 = vadd.xlane.f32.xlu0 %v835
      %v837 = vpop.xlane.xlu0 %836
      %v838 = vsel %vm761, %v814, 0.0
      %839 = vadd.xlane.f32.xlu0 %v838
      %v840 = vpop.xlane.xlu0 %839
      %v841 = vsel %vm768, %v816, 0.0
      %842 = vadd.xlane.f32.xlu0 %v841
      %v843 = vpop.xlane.xlu0 %842
      %v844 = vsel %vm761, %v818, 0.0
      %845 = vadd.xlane.f32.xlu0 %v844
      %v846 = vpop.xlane.xlu0 %845
      %v847 = vsel %vm761, %v820, 0.0
      %848 = vadd.xlane.f32.xlu0 %v847
      %v849 = vpop.xlane.xlu0 %848
      %v850 = vsel %vm768, %v822, 0.0
      %851 = vadd.xlane.f32.xlu0 %v850
      %v852 = vpop.xlane.xlu0 %851
      %v853 = vsel %vm761, %v824, 0.0
      %854 = vadd.xlane.f32.xlu0 %v853
      %v855 = vpop.xlane.xlu0 %854
      %v856 = vsel %vm761, %v826, 0.0
      %857 = vadd.xlane.f32.xlu0 %v856
      %v858 = vpop.xlane.xlu0 %857
      %v859 = vsel %vm768, %v828, 0.0
      %860 = vadd.xlane.f32.xlu0 %v859
      %v861 = vpop.xlane.xlu0 %860
      %v862 = vsel %vm761, %v830, 0.0
      %863 = vadd.xlane.f32.xlu0 %v862
      %v864 = vpop.xlane.xlu0 %863
      %v865 = vsel %vm761, %v832, 0.0
      %866 = vadd.xlane.f32.xlu0 %v865
      %v867 = vpop.xlane.xlu0 %866
      %v868 = vsel %vm768, %v834, 0.0
      %869 = vadd.xlane.f32.xlu0 %v868
      %v870 = vpop.xlane.xlu0 %869
      %v871 = vrcp.pop %v837
      %v872 = vrcp.pop %v840
      %v873 = vrcp.pop %v843
      %v874 = vrcp.pop %v846
      %v875 = vrcp.pop %v849
      %v876 = vrcp.pop %v852
      %v877 = vrcp.pop %v855
      %v878 = vrcp.pop %v858
      %v879 = vrcp.pop %v861
      %v880 = vrcp.pop %v864
      %v881 = vrcp.pop %v867
      %v882 = vrcp.pop %v870
      %v883 = vmul.f32 %v812, %v871
      %v884 = vmul.f32 %v814, %v872
      %v885 = vmul.f32 %v816, %v873
      %v886 = vmul.f32 %v818, %v874
      %v887 = vmul.f32 %v820, %v875
      %v888 = vmul.f32 %v822, %v876
      %v889 = vmul.f32 %v824, %v877
      %v890 = vmul.f32 %v826, %v878
      %v891 = vmul.f32 %v828, %v879
      %v892 = vmul.f32 %v830, %v880
      %v893 = vmul.f32 %v832, %v881
      %v894 = vmul.f32 %v834, %v882
      %v895 = vpack.c.bf16 %v883, %v883
      %v896 = vpack.c.bf16 %v884, %v884
      %v897 = vpack.c.bf16 %v885, %v885
      %v898 = vpack.c.bf16 %v886, %v886
      %v899 = vpack.c.bf16 %v887, %v887
      %v900 = vpack.c.bf16 %v888, %v888
      %v901 = vpack.c.bf16 %v889, %v889
      %v902 = vpack.c.bf16 %v890, %v890
      %v903 = vpack.c.bf16 %v891, %v891
      %v904 = vpack.c.bf16 %v892, %v892
      %v905 = vpack.c.bf16 %v893, %v893
      %v906 = vpack.c.bf16 %v894, %v894
      %v910 = vunpack.c.l.b16 %v895
      %v911 = vunpack.c.l.b16 %v896
      %v912 = vunpack.c.l.b16 %v897
      %v913 = vpack.c.b16 %v911, %v910
      %v914 = vpack.c.b16 %v912, %v912
      %915 = vrot.lane.b32.xlu0 %v607, 64
      %v916 = vpop.permute.xlu0 %915
      %917 = vrot.lane.b32.xlu0 %v608, 64
      %v918 = vpop.permute.xlu0 %917
      %v921 = vsel %vm761, %v913, 0
      %v924 = vsel %vm761, %v914, 0
      %vm926 = vcmask 1040384
      %v927 = vsel 0, 4294967295, 65535
      %v928 = vsel %vm926, %v927, 0
      %v930 = vand.u32 %v918, %v928
      %932 = vmatpush.bf16.msra.mxu0 0
      %933 = vmatpush.bf16.msra.mxu0 0
      %934 = vmatpush.bf16.msra.mxu0 0
      %935 = vmatpush.bf16.msra.mxu0 0
      %936 = vmatpush.bf16.msra.mxu0 0
      %937 = vmatpush.bf16.msra.mxu0 0
      %938 = vmatpush.bf16.msra.mxu0 %v930
      %939 = vmatpush.bf16.msra.mxu0 %v916
      %940 = vmatmul.bf16.gmra.mxu0 %v921
      %v941 = vpop.f32.mrf.mxu0
      %v942 = vadd.f32 0.0, %v941
      %v943 = vpop.f32.mrf.mxu0
      %v944 = vadd.f32 0.0, %v943
      %945 = vmatmul.bf16.gmra.mxu0 %v924
      %v946 = vpop.f32.mrf.mxu0
      %v947 = vadd.f32 0.0, %v946
      %v948 = vpop.f32.mrf.mxu0
      %949 = vdwg.mxu0
      %v953 = vunpack.c.l.b16 %v898
      %v954 = vunpack.c.l.b16 %v899
      %v955 = vunpack.c.l.b16 %v900
      %v956 = vpack.c.b16 %v954, %v953
      %v957 = vpack.c.b16 %v955, %v955
      %958 = vrot.lane.b32.xlu0 %v647, 64
      %v959 = vpop.permute.xlu0 %958
      %960 = vrot.lane.b32.xlu0 %v648, 64
      %v961 = vpop.permute.xlu0 %960
      %v964 = vsel %vm761, %v956, 0
      %v967 = vsel %vm761, %v957, 0
      %v970 = vand.u32 %v961, %v928
      %972 = vmatpush.bf16.msra.mxu0 0
      %973 = vmatpush.bf16.msra.mxu0 0
      %974 = vmatpush.bf16.msra.mxu0 0
      %975 = vmatpush.bf16.msra.mxu0 0
      %976 = vmatpush.bf16.msra.mxu0 0
      %977 = vmatpush.bf16.msra.mxu0 0
      %978 = vmatpush.bf16.msra.mxu0 %v970
      %979 = vmatpush.bf16.msra.mxu0 %v959
      %980 = vmatmul.bf16.gmra.mxu0 %v964
      %v981 = vpop.f32.mrf.mxu0
      %v982 = vadd.f32 0.0, %v981
      %v983 = vpop.f32.mrf.mxu0
      %v984 = vadd.f32 0.0, %v983
      %985 = vmatmul.bf16.gmra.mxu0 %v967
      %v986 = vpop.f32.mrf.mxu0
      %v987 = vadd.f32 0.0, %v986
      %v988 = vpop.f32.mrf.mxu0
      %989 = vdwg.mxu0
      %v993 = vunpack.c.l.b16 %v901
      %v994 = vunpack.c.l.b16 %v902
      %v995 = vunpack.c.l.b16 %v903
      %v996 = vpack.c.b16 %v994, %v993
      %v997 = vpack.c.b16 %v995, %v995
      %998 = vrot.lane.b32.xlu0 %v686, 64
      %v999 = vpop.permute.xlu0 %998
      %1000 = vrot.lane.b32.xlu0 %v687, 64
      %v1001 = vpop.permute.xlu0 %1000
      %v1004 = vsel %vm761, %v996, 0
      %v1007 = vsel %vm761, %v997, 0
      %v1010 = vand.u32 %v1001, %v928
      %1012 = vmatpush.bf16.msra.mxu0 0
      %1013 = vmatpush.bf16.msra.mxu0 0
      %1014 = vmatpush.bf16.msra.mxu0 0
      %1015 = vmatpush.bf16.msra.mxu0 0
      %1016 = vmatpush.bf16.msra.mxu0 0
      %1017 = vmatpush.bf16.msra.mxu0 0
      %1018 = vmatpush.bf16.msra.mxu0 %v1010
      %1019 = vmatpush.bf16.msra.mxu0 %v999
      %1020 = vmatmul.bf16.gmra.mxu0 %v1004
      %v1021 = vpop.f32.mrf.mxu0
      %v1022 = vadd.f32 0.0, %v1021
      %v1023 = vpop.f32.mrf.mxu0
      %v1024 = vadd.f32 0.0, %v1023
      %1025 = vmatmul.bf16.gmra.mxu0 %v1007
      %v1026 = vpop.f32.mrf.mxu0
      %v1027 = vadd.f32 0.0, %v1026
      %v1028 = vpop.f32.mrf.mxu0
      %1029 = vdwg.mxu0
      %v1033 = vunpack.c.l.b16 %v904
      %v1034 = vunpack.c.l.b16 %v905
      %v1035 = vunpack.c.l.b16 %v906
      %v1036 = vpack.c.b16 %v1034, %v1033
      %v1037 = vpack.c.b16 %v1035, %v1035
      %1038 = vrot.lane.b32.xlu0 %v725, 64
      %v1039 = vpop.permute.xlu0 %1038
      %1040 = vrot.lane.b32.xlu0 %v726, 64
      %v1041 = vpop.permute.xlu0 %1040
      %v1044 = vsel %vm761, %v1036, 0
      %v1047 = vsel %vm761, %v1037, 0
      %v1050 = vand.u32 %v1041, %v928
      %1052 = vmatpush.bf16.msra.mxu0 0
      %1053 = vmatpush.bf16.msra.mxu0 0
      %1054 = vmatpush.bf16.msra.mxu0 0
      %1055 = vmatpush.bf16.msra.mxu0 0
      %1056 = vmatpush.bf16.msra.mxu0 0
      %1057 = vmatpush.bf16.msra.mxu0 0
      %1058 = vmatpush.bf16.msra.mxu0 %v1050
      %1059 = vmatpush.bf16.msra.mxu0 %v1039
      %1060 = vmatmul.bf16.gmra.mxu0 %v1044
      %v1061 = vpop.f32.mrf.mxu0
      %v1062 = vadd.f32 0.0, %v1061
      %v1063 = vpop.f32.mrf.mxu0
      %v1064 = vadd.f32 0.0, %v1063
      %1065 = vmatmul.bf16.gmra.mxu0 %v1047
      %v1066 = vpop.f32.mrf.mxu0
      %v1067 = vadd.f32 0.0, %v1066
      %v1068 = vpop.f32.mrf.mxu0
      %1069 = vdwg.mxu0
      %v1070 = vpack.c.bf16 %v942, %v942
      %v1071 = vpack.c.bf16 %v944, %v944
      %v1072 = vpack.c.bf16 %v947, %v947
      %v1073 = vpack.c.bf16 %v982, %v982
      %v1074 = vpack.c.bf16 %v984, %v984
      %v1075 = vpack.c.bf16 %v987, %v987
      %v1076 = vpack.c.bf16 %v1022, %v1022
      %v1077 = vpack.c.bf16 %v1024, %v1024
      %v1078 = vpack.c.bf16 %v1027, %v1027
      %v1079 = vpack.c.bf16 %v1062, %v1062
      %v1080 = vpack.c.bf16 %v1064, %v1064
      %v1081 = vpack.c.bf16 %v1067, %v1067
      %v1085 = vunpack.c.l.b16 %v1070
      %v1086 = vunpack.c.l.b16 %v1071
      %v1087 = vunpack.c.l.b16 %v1072
      %v1088 = vpack.c.b16 %v1086, %v1085
      %v1089 = vpack.c.b16 %v1087, %v1087
      %v1093 = vunpack.c.l.b16 %v1073
      %v1094 = vunpack.c.l.b16 %v1074
      %v1095 = vunpack.c.l.b16 %v1075
      %v1096 = vpack.c.b16 %v1094, %v1093
      %v1097 = vpack.c.b16 %v1095, %v1095
      %1098 = vrot.lane.b32.xlu0 %v1096, 8
      %v1099 = vpop.permute.xlu0 %1098
      %1100 = vrot.lane.b32.xlu0 %v1097, 8
      %v1101 = vpop.permute.xlu0 %1100
      %v1105 = vunpack.c.l.b16 %v1076
      %v1106 = vunpack.c.l.b16 %v1077
      %v1107 = vunpack.c.l.b16 %v1078
      %v1108 = vpack.c.b16 %v1106, %v1105
      %v1109 = vpack.c.b16 %v1107, %v1107
      %1110 = vrot.lane.b32.xlu0 %v1108, 16
      %v1111 = vpop.permute.xlu0 %1110
      %1112 = vrot.lane.b32.xlu0 %v1109, 16
      %v1113 = vpop.permute.xlu0 %1112
      %v1117 = vunpack.c.l.b16 %v1079
      %v1118 = vunpack.c.l.b16 %v1080
      %v1119 = vunpack.c.l.b16 %v1081
      %v1120 = vpack.c.b16 %v1118, %v1117
      %v1121 = vpack.c.b16 %v1119, %v1119
      %1122 = vrot.lane.b32.xlu0 %v1120, 24
      %v1123 = vpop.permute.xlu0 %1122
      %1124 = vrot.lane.b32.xlu0 %v1121, 24
      %v1125 = vpop.permute.xlu0 %1124
      %v1128 = vsel %vm613, %v1088, %v1099
      %v1131 = vsel %vm613, %v1089, %v1101
      %vm1132 = vcmask 130048
      %v1134 = vsel %vm1132, %v1128, %v1111
      %v1136 = vsel %vm1132, %v1131, %v1113
      %vm1137 = vcmask 195584
      %v1139 = vsel %vm1137, %v1134, %v1123
      %v1141 = vsel %vm1137, %v1136, %v1125
      %v1142 = vld [vmem:[%s5] sm:$0xf]
      %v1143 = vld [vmem:[%s5 + $0x4] sm:$0xf]
      %v1144 = vld [vmem:[%s5 + $0x8] sm:$0xf]
      %v1145 = vld [vmem:[%s5 + $0xc] sm:$0xf]
      %v1146 = vld [vmem:[%s6] sm:$0x1]
      %v1148 = vperm.slane %v1146, 0
      %v1154 = vunpack.c.l.b16 %v1142
      %v1155 = vunpack.c.l.b16 %v1143
      %v1156 = vunpack.c.l.b16 %v1144
      %v1157 = vunpack.c.l.b16 %v1145
      %v1158 = vpack.c.b16 %v1155, %v1154
      %v1159 = vpack.c.b16 %v1157, %v1156
      %v1162 = vsel %vm447, %v1139, 0
      %v1164 = vsel %vm447, %v1141, 0
      %1166 = vmatpush.bf16.msra.mxu0 0
      %1167 = vmatpush.bf16.msra.mxu0 0
      %1168 = vmatpush.bf16.msra.mxu0 0
      %1169 = vmatpush.bf16.msra.mxu0 0
      %1170 = vmatpush.bf16.msra.mxu0 0
      %1171 = vmatpush.bf16.msra.mxu0 0
      %1172 = vmatpush.bf16.msra.mxu0 %v1159
      %1173 = vmatpush.bf16.msra.mxu0 %v1158
      %1174 = vmatmul.bf16.gmra.mxu0 %v1162
      %v1175 = vpop.f32.mrf.mxu0
      %v1176 = vadd.f32 %v1148, %v1175
      %v1177 = vpop.f32.mrf.mxu0
      %v1178 = vadd.f32 %v1148, %v1177
      %1179 = vmatmul.bf16.gmra.mxu0 %v1164
      %v1180 = vpop.f32.mrf.mxu0
      %v1181 = vadd.f32 %v1148, %v1180
      %v1182 = vpop.f32.mrf.mxu0
      %1183 = vdwg.mxu0
      %v1184 = vadd.f32 %v442, %v1176
      %v1185 = vadd.f32 %v443, %v1178
      %v1186 = vadd.f32 %v444, %v1181
      %v1187 = vld [vmem:[%s7] sm:$0x1]
      %v1188 = vld [vmem:[%s8] sm:$0x1]
      %v1189 = vsel %vm447, %v1184, 0.0
      %1190 = vadd.xlane.f32.xlu0 %v1189
      %v1191 = vpop.xlane.xlu0 %1190
      %v1192 = vsel %vm447, %v1185, 0.0
      %1193 = vadd.xlane.f32.xlu0 %v1192
      %v1194 = vpop.xlane.xlu0 %1193
      %v1195 = vsel %vm454, %v1186, 0.0
      %1196 = vadd.xlane.f32.xlu0 %v1195
      %v1197 = vpop.xlane.xlu0 %1196
      %v1198 = vmul.f32 %v1191, %v464
      %v1199 = vmul.f32 %v1194, %v464
      %v1200 = vmul.f32 %v1197, %v464
      %v1201 = vsub.f32 %v1184, %v1198
      %v1202 = vsub.f32 %v1185, %v1199
      %v1203 = vsub.f32 %v1186, %v1200
      %v1204 = vmul.f32 %v1201, %v1201
      %v1205 = vmul.f32 %v1202, %v1202
      %v1206 = vmul.f32 %v1203, %v1203
      %v1207 = vsel %vm447, %v1204, 0.0
      %1208 = vadd.xlane.f32.xlu0 %v1207
      %v1209 = vpop.xlane.xlu0 %1208
      %v1210 = vsel %vm447, %v1205, 0.0
      %1211 = vadd.xlane.f32.xlu0 %v1210
      %v1212 = vpop.xlane.xlu0 %1211
      %v1213 = vsel %vm454, %v1206, 0.0
      %1214 = vadd.xlane.f32.xlu0 %v1213
      %v1215 = vpop.xlane.xlu0 %1214
      %v1216 = vmul.f32 %v1209, %v464
      %v1217 = vmul.f32 %v1212, %v464
      %v1218 = vmul.f32 %v1215, %v464
      %v1219 = vadd.f32 %v1216, 1e-06
      %v1220 = vadd.f32 %v1217, 1e-06
      %v1221 = vadd.f32 %v1218, 1e-06
      %v1222 = vrsqrt.pop %v1219
      %v1223 = vmul.f32 %v1222, %v1219
      %v1224 = vmul.f32 %v1223, %v1222
      %v1225 = vmul.f32 0.5, %v1224
      %v1226 = vsub.f32 1.5, %v1225
      %v1227 = vmul.f32 %v1222, %v1226
      %vm1228 = vweird.f32 %v1219
      %vm1229 = vweird.f32 %v1222
      %vm1230 = vmor %vm1228, %vm1229
      %v1231 = vsel %vm1230, %v1222, %v1227
      %v1232 = vrsqrt.pop %v1220
      %v1233 = vmul.f32 %v1232, %v1220
      %v1234 = vmul.f32 %v1233, %v1232
      %v1235 = vmul.f32 0.5, %v1234
      %v1236 = vsub.f32 1.5, %v1235
      %v1237 = vmul.f32 %v1232, %v1236
      %vm1238 = vweird.f32 %v1220
      %vm1239 = vweird.f32 %v1232
      %vm1240 = vmor %vm1238, %vm1239
      %v1241 = vsel %vm1240, %v1232, %v1237
      %v1242 = vrsqrt.pop %v1221
      %v1243 = vmul.f32 %v1242, %v1221
      %v1244 = vmul.f32 %v1243, %v1242
      %v1245 = vmul.f32 0.5, %v1244
      %v1246 = vsub.f32 1.5, %v1245
      %v1247 = vmul.f32 %v1242, %v1246
      %vm1248 = vweird.f32 %v1221
      %vm1249 = vweird.f32 %v1242
      %vm1250 = vmor %vm1248, %vm1249
      %v1251 = vsel %vm1250, %v1242, %v1247
      %v1252 = vmul.f32 %v1201, %v1231
      %v1253 = vmul.f32 %v1202, %v1241
      %v1254 = vmul.f32 %v1203, %v1251
      %v1256 = vperm.slane %v1187, 0
      %v1258 = vmul.f32 %v1252, %v1256
      %v1259 = vmul.f32 %v1253, %v1256
      %v1260 = vmul.f32 %v1254, %v1256
      %v1262 = vperm.slane %v1188, 0
      %v1264 = vadd.f32 %v1258, %v1262
      %v1265 = vadd.f32 %v1259, %v1262
      %v1266 = vadd.f32 %v1260, %v1262
      %v1267 = vpack.c.bf16 %v1265, %v1264
      %v1268 = vpack.c.bf16 %v1266, %v1266
      %v1269 = vld [vmem:[%s9] sm:$0xf]
      %v1270 = vld [vmem:[%s9 + $0x4] sm:$0xf]
      %v1271 = vld [vmem:[%s9 + $0x8] sm:$0xf]
      %v1272 = vld [vmem:[%s9 + $0xc] sm:$0xf]
      %v1273 = vld [vmem:[%s10] sm:$0x1]
      %v1275 = vperm.slane %v1273, 0
      %v1281 = vunpack.c.l.b16 %v1269
      %v1282 = vunpack.c.l.b16 %v1270
      %v1283 = vunpack.c.l.b16 %v1271
      %v1284 = vunpack.c.l.b16 %v1272
      %v1285 = vpack.c.b16 %v1282, %v1281
      %v1286 = vpack.c.b16 %v1284, %v1283
      %v1290 = vsel %vm447, %v1267, 0
      %v1293 = vsel %vm447, %v1268, 0
      %1295 = vmatpush.bf16.msra.mxu0 0
      %1296 = vmatpush.bf16.msra.mxu0 0
      %1297 = vmatpush.bf16.msra.mxu0 0
      %1298 = vmatpush.bf16.msra.mxu0 0
      %1299 = vmatpush.bf16.msra.mxu0 0
      %1300 = vmatpush.bf16.msra.mxu0 0
      %1301 = vmatpush.bf16.msra.mxu0 %v1286
      %1302 = vmatpush.bf16.msra.mxu0 %v1285
      %1303 = vmatmul.bf16.gmra.mxu0 %v1290
      %v1304 = vpop.f32.mrf.mxu0
      %v1305 = vadd.f32 %v1275, %v1304
      %v1306 = vpop.f32.mrf.mxu0
      %v1307 = vadd.f32 %v1275, %v1306
      %1308 = vmatmul.bf16.gmra.mxu0 %v1293
      %v1309 = vpop.f32.mrf.mxu0
      %v1310 = vadd.f32 %v1275, %v1309
      %v1311 = vpop.f32.mrf.mxu0
      %1312 = vdwg.mxu0
      %v1313 = vmul.f32 %v1305, 0.5
      %v1314 = vmul.f32 %v1307, 0.5
      %v1315 = vmul.f32 %v1310, 0.5
      %v1316 = vmul.f32 %v1305, 0.044715
      %v1317 = vmul.f32 %v1307, 0.044715
      %v1318 = vmul.f32 %v1310, 0.044715
      %v1319 = vmul.f32 %v1316, %v1305
      %v1320 = vmul.f32 %v1317, %v1307
      %v1321 = vmul.f32 %v1318, %v1310
      %v1322 = vmul.f32 %v1319, %v1305
      %v1323 = vmul.f32 %v1320, %v1307
      %v1324 = vmul.f32 %v1321, %v1310
      %v1325 = vadd.f32 %v1305, %v1322
      %v1326 = vadd.f32 %v1307, %v1323
      %v1327 = vadd.f32 %v1310, %v1324
      %v1328 = vmul.f32 %v1325, 0.7978846
      %v1329 = vmul.f32 %v1326, 0.7978846
      %v1330 = vmul.f32 %v1327, 0.7978846
      %v1331 = vtanh.pop %v1328
      %v1332 = vtanh.pop %v1329
      %v1333 = vtanh.pop %v1330
      %v1334 = vadd.f32 %v1331, 1.0
      %v1335 = vadd.f32 %v1332, 1.0
      %v1336 = vadd.f32 %v1333, 1.0
      %v1337 = vmul.f32 %v1313, %v1334
      %v1338 = vmul.f32 %v1314, %v1335
      %v1339 = vmul.f32 %v1315, %v1336
      %v1340 = vpack.c.bf16 %v1338, %v1337
      %v1341 = vpack.c.bf16 %v1339, %v1339
      %v1342 = vld [vmem:[%s11] sm:$0xf]
      %v1343 = vld [vmem:[%s11 + $0x4] sm:$0xf]
      %v1344 = vld [vmem:[%s11 + $0x8] sm:$0xf]
      %v1345 = vld [vmem:[%s11 + $0xc] sm:$0xf]
      %v1346 = vld [vmem:[%s11 + $0x10] sm:$0xf]
      %v1347 = vld [vmem:[%s11 + $0x14] sm:$0xf]
      %v1348 = vld [vmem:[%s11 + $0x18] sm:$0xf]
      %v1349 = vld [vmem:[%s11 + $0x1c] sm:$0xf]
      %v1350 = vld [vmem:[%s11 + $0x20] sm:$0xf]
      %v1351 = vld [vmem:[%s11 + $0x24] sm:$0xf]
      %v1352 = vld [vmem:[%s11 + $0x28] sm:$0xf]
      %v1353 = vld [vmem:[%s11 + $0x2c] sm:$0xf]
      %v1354 = vld [vmem:[%s11 + $0x30] sm:$0xf]
      %v1355 = vld [vmem:[%s11 + $0x34] sm:$0xf]
      %v1356 = vld [vmem:[%s11 + $0x38] sm:$0xf]
      %v1357 = vld [vmem:[%s11 + $0x3c] sm:$0xf]
      %v1358 = vld [vmem:[%s12] sm:$0x1]
      %v1360 = vperm.slane %v1358, 0
      %v1378 = vunpack.c.l.b16 %v1342
      %v1379 = vunpack.c.l.b16 %v1343
      %v1380 = vunpack.c.l.b16 %v1344
      %v1381 = vunpack.c.l.b16 %v1345
      %v1382 = vunpack.c.l.b16 %v1346
      %v1383 = vunpack.c.l.b16 %v1347
      %v1384 = vunpack.c.l.b16 %v1348
      %v1385 = vunpack.c.l.b16 %v1349
      %v1386 = vunpack.c.l.b16 %v1350
      %v1387 = vunpack.c.l.b16 %v1351
      %v1388 = vunpack.c.l.b16 %v1352
      %v1389 = vunpack.c.l.b16 %v1353
      %v1390 = vunpack.c.l.b16 %v1354
      %v1391 = vunpack.c.l.b16 %v1355
      %v1392 = vunpack.c.l.b16 %v1356
      %v1393 = vunpack.c.l.b16 %v1357
      %v1394 = vpack.c.b16 %v1379, %v1378
      %v1395 = vpack.c.b16 %v1381, %v1380
      %v1396 = vpack.c.b16 %v1383, %v1382
      %v1397 = vpack.c.b16 %v1385, %v1384
      %v1398 = vpack.c.b16 %v1387, %v1386
      %v1399 = vpack.c.b16 %v1389, %v1388
      %v1400 = vpack.c.b16 %v1391, %v1390
      %v1401 = vpack.c.b16 %v1393, %v1392
      %1410 = vmatpush.bf16.msra.mxu0 %v1401
      %1411 = vmatpush.bf16.msra.mxu0 %v1400
      %1412 = vmatpush.bf16.msra.mxu0 %v1399
      %1413 = vmatpush.bf16.msra.mxu0 %v1398
      %1414 = vmatpush.bf16.msra.mxu0 %v1397
      %1415 = vmatpush.bf16.msra.mxu0 %v1396
      %1416 = vmatpush.bf16.msra.mxu0 %v1395
      %1417 = vmatpush.bf16.msra.mxu0 %v1394
      %1418 = vmatmul.bf16.gmra.mxu0 %v1340
      %v1419 = vpop.f32.mrf.mxu0
      %v1420 = vadd.f32 %v1360, %v1419
      %v1421 = vpop.f32.mrf.mxu0
      %v1422 = vadd.f32 %v1360, %v1421
      %1423 = vmatmul.bf16.gmra.mxu0 %v1341
      %v1424 = vpop.f32.mrf.mxu0
      %v1425 = vadd.f32 %v1360, %v1424
      %v1426 = vpop.f32.mrf.mxu0
      %1427 = vdwg.mxu0
      %v1428 = vadd.f32 %v1184, %v1420
      %v1429 = vadd.f32 %v1185, %v1422
      %v1430 = vadd.f32 %v1186, %v1425
      %1431 = vst.msk [vmem:[%s440] sm:$0xff] %vm447, %v1428
      %1432 = vst.msk [vmem:[%s440 + $0x8] sm:$0xff] %vm447, %v1429
      %1433 = vst.msk [vmem:[%s440 + $0x10] sm:$0x1] %vm454, %v1430
      %p1434 = scmp.lt.s32.totalorder %s24, 1
      %s1435 = scalar_select %p1434, %s24, 1
      %s1436 = smul.addr %s1435, 3
      %s1437 = smul.addr %s1436, 8
      %s1438 = scalar_lea.vmem %s13, %s1437
      // Predicated region
      $region73: #{vit_forward.5} parent=71 // pred_check
        %p1439 = pneg %p320
      $region74: #{vit_forward.5} parent=71 // pred_check_branch
        %1441 = sbr.rel (%p1439) target = $region76
      $region75: #{vit_forward.5} parent=71 // pred_region
        _
      $region76: #{vit_forward.5} parent=71 // pred_fallthru
        _
    $region72: #{vit_forward.5} parent=5 // pred_fallthru
      _
    %p1442 = scmp.le.s32.totalorder 2, %s19
    // Predicated region
    $region77: #{vit_forward.5} parent=5 // pred_check
      %p1443 = pneg %p1442
    $region78: #{vit_forward.5} parent=5 // pred_check_branch
      %1445 = sbr.rel (%p1443) target = $region80
    $region79: #{vit_forward.5} parent=5 // pred_region
      %s1446 = ssub.s32 %s19, 2
      // Predicated region
      $region81: #{vit_forward.5} parent=79 // pred_check
        %p1447 = pneg %p326
      $region82: #{vit_forward.5} parent=79 // pred_check_branch
        %1449 = sbr.rel (%p1447) target = $region84
      $region83: #{vit_forward.5} parent=79 // pred_region
        %p1450 = scmp.lt.s32.totalorder %s25, 1
        %s1451 = scalar_select %p1450, %s25, 1
        %s1452 = smul.addr %s1451, 3
        %s1453 = smul.addr %s1452, 8
        %s1454 = scalar_lea.vmem %s13, %s1453
      $region84: #{vit_forward.5} parent=79 // pred_fallthru
        _
    $region80: #{vit_forward.5} parent=5 // pred_fallthru
      _
  $region6: #{vit_forward.5} parent=0 // loop_footer
    %s23 = sadd.s32 1, %s19
  $region7: #{vit_forward.5} parent=0 // loop_footer_branch
    %18 = sbr.rel target = $region3
  $region8: #{vit_forward.5} parent=0 // loop_exit
    _

</llo_original>
